<compile_context>
chip_gen: v5e
topology: v5e:2x2
jax: 0.10.0
libtpu: 0.0.40
codegen_flags: <defaults>
</compile_context>

<pallas_src>
import jax
import jax.numpy as jnp
from jax.experimental import pallas as pl
from jax.experimental.pallas import tpu as pltpu

LN_EPS = 1e-5      # nn.LayerNorm default eps
NORM_EPS = 1e-12   # F.normalize default eps


# --------------------------------------------------------------------------- kernel
def _repr_descriptor_kernel(x_ref, w1t_ref, b1_ref, w2t_ref, b2_ref,
                            m_ref, bfull_ref, out_ref, xflat_ref):
    """One grid step = TN samples.

    x_ref     : (TN*C, HW)   bf16, rows ordered sample-major / channel-minor
    w1t_ref   : (D, HW, HID) bf16   (LN affine folded in)
    b1_ref    : (D, 1, HID)  f32
    w2t_ref   : (D, HID, HW) bf16
    b2_ref    : (D, 1, HW)   f32
    m_ref     : (C*HW, 256)  bf16   fused channel_proj . row_proj . final_proj
    bfull_ref : (1, 256)     f32    fused bias
    out_ref   : (TN, 1, 256) f32
    xflat_ref : (TN, C*HW)   f32    VMEM scratch (per-sample flattened mixer out)
    """
    mix_depth = w1t_ref.shape[0]
    rows, hw = x_ref.shape
    tn = out_ref.shape[0]
    c = rows // tn
    inv_hw = 1.0 / hw

    x = x_ref[...].astype(jnp.float32)                  # (TN*C, HW) f32

    # ---- FeatureMixerLayer stack: LN (affine folded) -> Linear -> ReLU -> Linear, residual
    for d in range(mix_depth):                          # static unroll (small depth)
        mu = jnp.sum(x, axis=-1, keepdims=True) * inv_hw
        xc = x - mu
        var = jnp.sum(xc * xc, axis=-1, keepdims=True) * inv_hw   # two-pass variance
        xn = xc * jax.lax.rsqrt(var + LN_EPS)
        h = jnp.dot(xn.astype(jnp.bfloat16), w1t_ref[d],
                    preferred_element_type=jnp.float32) + b1_ref[d]
        h = jnp.maximum(h, 0.0)
        h = jnp.dot(h.astype(jnp.bfloat16), w2t_ref[d],
                    preferred_element_type=jnp.float32) + b2_ref[d]
        x = x + h                                       # residual (f32)

    # ---- relayout (TN*C, HW) -> (TN, C*HW) via explicit lane-window stores
    #      (C tiny static copies; avoids an unsupported sublane->lane reshape).
    x3 = x.reshape(tn, c, hw)                           # leading-dim split only
    for ci in range(c):                                 # static unroll (C small)
        xflat_ref[:, ci * hw:(ci + 1) * hw] = x3[:, ci, :]

    # ---- fused channel_proj + row_proj + final_proj: ONE lane-dense MXU matmul
    o = jnp.dot(xflat_ref[...].astype(jnp.bfloat16), m_ref[...],
                preferred_element_type=jnp.float32) + bfull_ref[...]   # (TN, 256)

    # ---- per-sample L2 normalize (row-wise; a full-tile sum would mix samples)
    ss = jnp.sum(o * o, axis=-1, keepdims=True)
    out_ref[:, 0, :] = o * jax.lax.rsqrt(jnp.maximum(ss, NORM_EPS * NORM_EPS))


# --------------------------------------------------------------------------- params
def make_params(key, in_channels, hw, out_channels, out_rows, mix_depth, mlp_ratio):
    """Raw (PyTorch-layout) parameters."""
    hid = int(hw * mlp_ratio)
    ks = jax.random.split(key, 8)

    def tn(k, shape, std=0.02):
        return (std * jax.random.truncated_normal(k, -2.0, 2.0, shape)).astype(jnp.float32)

    return dict(
        gamma=jnp.ones((mix_depth, hw), jnp.float32),
        beta=jnp.zeros((mix_depth, hw), jnp.float32),
        w1=tn(ks[0], (mix_depth, hid, hw)),            # Linear(hw, hid).weight
        b1=jnp.zeros((mix_depth, hid), jnp.float32),
        w2=tn(ks[1], (mix_depth, hw, hid)),            # Linear(hid, hw).weight
        b2=jnp.zeros((mix_depth, hw), jnp.float32),
        wc=tn(ks[2], (out_channels, in_channels)),     # channel_proj.weight
        bc=tn(ks[3], (out_channels,)),
        wr=tn(ks[4], (out_rows, hw)),                  # row_proj.weight
        br=tn(ks[5], (out_rows,)),
        wf=tn(ks[6], (256, out_channels * out_rows)),  # final_proj.weight
        bf=tn(ks[7], (256,)),
    )


def prepare_kernel_params(p):
    """Host-side folds/fusions + bf16 casts for the kernel weights."""
    mix_depth, hid, hw = p["w1"].shape
    oc, c = p["wc"].shape
    orr = p["wr"].shape[0]

    # fold LN affine into the first mixer Linear:
    #   (xhat*g + b) @ W1^T = xhat @ (g[:,None]*W1^T) + (b @ W1^T)
    w1t = jnp.swapaxes(p["w1"], 1, 2)                                  # (D, HW, HID)
    w1t_f = p["gamma"][:, :, None] * w1t
    b1_f = p["b1"] + jnp.einsum("dh,dhk->dk", p["beta"], w1t)          # (D, HID)
    w2t = jnp.swapaxes(p["w2"], 1, 2)                                  # (D, HID, HW)

    # fuse row_proj + final_proj:  B[o,h,k] = sum_j Wf[k, o*OR+j] * Wr[j,h]
    wf3 = p["wf"].reshape(256, oc, orr)                                # wf3[k,o,j]
    B = jnp.einsum("koj,jh->ohk", wf3, p["wr"])                        # (OC, HW, 256)
    b_rf = p["bf"] + jnp.einsum("koj,j->k", wf3, p["br"])              # (256,)

    # fuse channel_proj on top:  M[c,h,k] = sum_o Wc[o,c] * B[o,h,k]
    #   bias_full[k] = b_rf[k] + sum_{o,h} bc[o] * B[o,h,k]
    M = jnp.einsum("oc,ohk->chk", p["wc"], B)                          # (C, HW, 256)
    bias_full = b_rf + jnp.einsum("o,ohk->k", p["bc"], B)              # (256,)
    m_flat = M.reshape(c * hw, 256)

    return dict(
        w1t=w1t_f.astype(jnp.bfloat16),
        b1=b1_f[:, None, :].astype(jnp.float32),        # (D, 1, HID)
        w2t=w2t.astype(jnp.bfloat16),
        b2=p["b2"][:, None, :].astype(jnp.float32),     # (D, 1, HW)
        M=m_flat.astype(jnp.bfloat16),                  # (C*HW, 256)
        bfull=bias_full[None, :].astype(jnp.float32),   # (1, 256)
    )


# --------------------------------------------------------------------------- wrapper
def _const_index_map(nd):
    def imap(i):
        return (0,) * nd
    return imap


def _default_tile_n(n):
    # Fill the MXU M dim (TN*C rows) while keeping the grid length >= 2 so the
    # 'parallel' batch axis can still shard across v7x's two TensorCores.
    return max(1, min(8, pl.cdiv(n, 2)))


def repr_descriptor(x, kp, tile_n=None):
    """x: (N, C, H, W) -> (N, 256) L2-normalized descriptors."""
    n, c, h, w = x.shape
    hw = h * w
    if tile_n is None:
        tile_n = _default_tile_n(n)
    n_pad = pl.cdiv(n, tile_n) * tile_n

    xr = x.reshape(n, c, hw).astype(jnp.bfloat16)       # bf16 input DMA
    if n_pad != n:
        xr = jnp.concatenate(
            [xr, jnp.zeros((n_pad - n, c, hw), xr.dtype)], axis=0)
    x2 = xr.reshape(n_pad * c, hw)                      # rows: sample-major, channel-minor

    weights = (kp["w1t"], kp["b1"], kp["w2t"], kp["b2"], kp["M"], kp["bfull"])

    in_specs = [pl.BlockSpec((tile_n * c, hw), lambda i: (i, 0))]
    # weights: full-array blocks with constant index maps -> fetched once, VMEM-resident
    in_specs += [pl.BlockSpec(wt.shape, _const_index_map(wt.ndim)) for wt in weights]

    out = pl.pallas_call(
        _repr_descriptor_kernel,
        out_shape=jax.ShapeDtypeStruct((n_pad, 1, 256), jnp.float32),
        grid=(n_pad // tile_n,),
        in_specs=in_specs,
        out_specs=pl.BlockSpec((tile_n, 1, 256), lambda i: (i, 0, 0)),
        scratch_shapes=[pltpu.VMEM((tile_n, c * hw), jnp.float32)],
        compiler_params=pltpu.CompilerParams(
            dimension_semantics=("parallel",),
            vmem_limit_bytes=32 * 1024 * 1024),
    )(x2, *weights)
    return out[:n, 0, :]


# --------------------------------------------------------------------------- reference
def reference(x, p):
    """Pure-JAX mirror of the PyTorch forward (single sample, unfused weights)."""
    c, h, w = x.shape
    y = x.reshape(c, h * w).astype(jnp.float32)
    for d in range(p["w1"].shape[0]):
        mu = y.mean(-1, keepdims=True)
        var = ((y - mu) ** 2).mean(-1, keepdims=True)
        yn = (y - mu) / jnp.sqrt(var + LN_EPS) * p["gamma"][d] + p["beta"][d]
        hid = jnp.maximum(yn @ p["w1"][d].T + p["b1"][d], 0.0) @ p["w2"][d].T + p["b2"][d]
        y = y + hid
    z = (y.T @ p["wc"].T + p["bc"]).T            # permute -> channel_proj -> permute
    r = z @ p["wr"].T + p["br"]                  # row_proj
    o = p["wf"] @ r.reshape(-1) + p["bf"]        # final_proj on flatten(0)
    return o / jnp.maximum(jnp.linalg.norm(o), NORM_EPS)


# --------------------------------------------------------------------------- main
if __name__ == "__main__":
    batch = 2
    in_h, in_w = 4, 8
    in_channels = 16
    out_channels = 8
    out_rows = 4
    mix_depth = 2
    mlp_ratio = 1
    hw = in_h * in_w

    key = jax.random.PRNGKey(0)
    kx, kparam = jax.random.split(key)
    x = jax.random.normal(kx, (batch, in_channels, in_h, in_w), dtype=jnp.float32)
    raw = make_params(kparam, in_channels, hw, out_channels, out_rows, mix_depth, mlp_ratio)
    kparams = prepare_kernel_params(raw)

    out = repr_descriptor(x, kparams)
    out = jax.block_until_ready(out)

    ref = jnp.stack([reference(x[i], raw) for i in range(batch)])
    assert out.shape == (batch, 256), out.shape
    assert bool(jnp.all(jnp.isfinite(out)))
    err = float(jnp.max(jnp.abs(out - ref)))
    assert bool(jnp.allclose(out, ref, rtol=1e-2, atol=1e-2)), (
        "mismatch vs reference, max abs diff = %f" % err)

    print("KERNEL_OK")
</pallas_src>

<mosaic_0001>
module attributes {stable_mosaic.version = 11 : i64} {
  func.func @_repr_descriptor_kernel(%arg0: i32, %arg1: memref<16x32xbf16, #tpu.memory_space<vmem>>, %arg2: memref<2x32x32xbf16, #tpu.memory_space<vmem>>, %arg3: memref<2x1x32xf32, #tpu.memory_space<vmem>>, %arg4: memref<2x32x32xbf16, #tpu.memory_space<vmem>>, %arg5: memref<2x1x32xf32, #tpu.memory_space<vmem>>, %arg6: memref<512x256xbf16, #tpu.memory_space<vmem>>, %arg7: memref<1x256xf32, #tpu.memory_space<vmem>>, %arg8: memref<1x1x256xf32, #tpu.memory_space<vmem>>, %arg9: memref<1x512xf32, #tpu.memory_space<vmem>>) attributes {dimension_semantics = [#tpu.dimension_semantics<parallel>], iteration_bounds = array<i64: 2>, scalar_prefetch = 0 : i64, scratch_operands = 1 : i64, tpu.core_type = #tpu.core_type<tc>, window_params = [{transform_indices = @transform_0, window_bounds = array<i64: 16, 32>}, {pipeline_mode = #tpu.pipeline_mode<synchronous>, transform_indices = @transform_1, window_bounds = array<i64: 2, 32, 32>}, {pipeline_mode = #tpu.pipeline_mode<synchronous>, transform_indices = @transform_2, window_bounds = array<i64: 2, 1, 32>}, {pipeline_mode = #tpu.pipeline_mode<synchronous>, transform_indices = @transform_3, window_bounds = array<i64: 2, 32, 32>}, {pipeline_mode = #tpu.pipeline_mode<synchronous>, transform_indices = @transform_4, window_bounds = array<i64: 2, 1, 32>}, {pipeline_mode = #tpu.pipeline_mode<synchronous>, transform_indices = @transform_5, window_bounds = array<i64: 512, 256>}, {pipeline_mode = #tpu.pipeline_mode<synchronous>, transform_indices = @transform_6, window_bounds = array<i64: 1, 256>}, {transform_indices = @transform_7, window_bounds = array<i64: 1, 1, 256>}]} {
    %c0 = arith.constant 0 : index
    %c0_0 = arith.constant 0 : index
    %0 = vector.load %arg1[%c0, %c0_0] : memref<16x32xbf16, #tpu.memory_space<vmem>>, vector<16x32xbf16>
    %1 = arith.extf %0 : vector<16x32xbf16> to vector<16x32xf32>
    %cst = arith.constant dense<0.000000e+00> : vector<16xf32>
    %2 = vector.multi_reduction <add>, %1, %cst [1] : vector<16x32xf32> to vector<16xf32>
    %3 = vector.shape_cast %2 : vector<16xf32> to vector<16x1xf32>
    %cst_1 = arith.constant 3.125000e-02 : f32
    %4 = vector.broadcast %cst_1 : f32 to vector<16x1xf32>
    %5 = arith.mulf %3, %4 : vector<16x1xf32>
    %6 = vector.broadcast %5 : vector<16x1xf32> to vector<16x32xf32>
    %7 = arith.subf %1, %6 : vector<16x32xf32>
    %8 = arith.mulf %7, %7 : vector<16x32xf32>
    %cst_2 = arith.constant dense<0.000000e+00> : vector<16xf32>
    %9 = vector.multi_reduction <add>, %8, %cst_2 [1] : vector<16x32xf32> to vector<16xf32>
    %10 = vector.shape_cast %9 : vector<16xf32> to vector<16x1xf32>
    %cst_3 = arith.constant 3.125000e-02 : f32
    %11 = vector.broadcast %cst_3 : f32 to vector<16x1xf32>
    %12 = arith.mulf %10, %11 : vector<16x1xf32>
    %cst_4 = arith.constant 9.99999974E-6 : f32
    %13 = vector.broadcast %cst_4 : f32 to vector<16x1xf32>
    %14 = arith.addf %12, %13 : vector<16x1xf32>
    %15 = math.rsqrt %14 : vector<16x1xf32>
    %16 = vector.broadcast %15 : vector<16x1xf32> to vector<16x32xf32>
    %17 = arith.mulf %7, %16 : vector<16x32xf32>
    %18 = arith.truncf %17 : vector<16x32xf32> to vector<16x32xbf16>
    %c0_5 = arith.constant 0 : index
    %c0_6 = arith.constant 0 : index
    %c0_7 = arith.constant 0 : index
    %19 = vector.load %arg2[%c0_5, %c0_6, %c0_7] : memref<2x32x32xbf16, #tpu.memory_space<vmem>>, vector<1x32x32xbf16>
    %20 = vector.shape_cast %19 : vector<1x32x32xbf16> to vector<32x32xbf16>
    %cst_8 = arith.constant dense<0.000000e+00> : vector<16x32xf32>
    %21 = tpu.matmul %18, %20, %cst_8 {dimension_numbers = #tpu.dot_dimension_numbers<[1], [0], [0], [1], [0, 0, 1, 1], [], []>} : vector<16x32xbf16>, vector<32x32xbf16>, vector<16x32xf32> -> vector<16x32xf32>
    %c0_9 = arith.constant 0 : index
    %c0_10 = arith.constant 0 : index
    %c0_11 = arith.constant 0 : index
    %22 = vector.load %arg3[%c0_9, %c0_10, %c0_11] : memref<2x1x32xf32, #tpu.memory_space<vmem>>, vector<1x1x32xf32>
    %23 = vector.shape_cast %22 : vector<1x1x32xf32> to vector<1x32xf32>
    %24 = vector.broadcast %23 : vector<1x32xf32> to vector<16x32xf32>
    %25 = arith.addf %21, %24 : vector<16x32xf32>
    %cst_12 = arith.constant 0.000000e+00 : f32
    %26 = vector.broadcast %cst_12 : f32 to vector<16x32xf32>
    %27 = arith.maximumf %25, %26 : vector<16x32xf32>
    %28 = arith.truncf %27 : vector<16x32xf32> to vector<16x32xbf16>
    %c0_13 = arith.constant 0 : index
    %c0_14 = arith.constant 0 : index
    %c0_15 = arith.constant 0 : index
    %29 = vector.load %arg4[%c0_13, %c0_14, %c0_15] : memref<2x32x32xbf16, #tpu.memory_space<vmem>>, vector<1x32x32xbf16>
    %30 = vector.shape_cast %29 : vector<1x32x32xbf16> to vector<32x32xbf16>
    %cst_16 = arith.constant dense<0.000000e+00> : vector<16x32xf32>
    %31 = tpu.matmul %28, %30, %cst_16 {dimension_numbers = #tpu.dot_dimension_numbers<[1], [0], [0], [1], [0, 0, 1, 1], [], []>} : vector<16x32xbf16>, vector<32x32xbf16>, vector<16x32xf32> -> vector<16x32xf32>
    %c0_17 = arith.constant 0 : index
    %c0_18 = arith.constant 0 : index
    %c0_19 = arith.constant 0 : index
    %32 = vector.load %arg5[%c0_17, %c0_18, %c0_19] : memref<2x1x32xf32, #tpu.memory_space<vmem>>, vector<1x1x32xf32>
    %33 = vector.shape_cast %32 : vector<1x1x32xf32> to vector<1x32xf32>
    %34 = vector.broadcast %33 : vector<1x32xf32> to vector<16x32xf32>
    %35 = arith.addf %31, %34 : vector<16x32xf32>
    %36 = arith.addf %1, %35 : vector<16x32xf32>
    %cst_20 = arith.constant dense<0.000000e+00> : vector<16xf32>
    %37 = vector.multi_reduction <add>, %36, %cst_20 [1] : vector<16x32xf32> to vector<16xf32>
    %38 = vector.shape_cast %37 : vector<16xf32> to vector<16x1xf32>
    %cst_21 = arith.constant 3.125000e-02 : f32
    %39 = vector.broadcast %cst_21 : f32 to vector<16x1xf32>
    %40 = arith.mulf %38, %39 : vector<16x1xf32>
    %41 = vector.broadcast %40 : vector<16x1xf32> to vector<16x32xf32>
    %42 = arith.subf %36, %41 : vector<16x32xf32>
    %43 = arith.mulf %42, %42 : vector<16x32xf32>
    %cst_22 = arith.constant dense<0.000000e+00> : vector<16xf32>
    %44 = vector.multi_reduction <add>, %43, %cst_22 [1] : vector<16x32xf32> to vector<16xf32>
    %45 = vector.shape_cast %44 : vector<16xf32> to vector<16x1xf32>
    %cst_23 = arith.constant 3.125000e-02 : f32
    %46 = vector.broadcast %cst_23 : f32 to vector<16x1xf32>
    %47 = arith.mulf %45, %46 : vector<16x1xf32>
    %cst_24 = arith.constant 9.99999974E-6 : f32
    %48 = vector.broadcast %cst_24 : f32 to vector<16x1xf32>
    %49 = arith.addf %47, %48 : vector<16x1xf32>
    %50 = math.rsqrt %49 : vector<16x1xf32>
    %51 = vector.broadcast %50 : vector<16x1xf32> to vector<16x32xf32>
    %52 = arith.mulf %42, %51 : vector<16x32xf32>
    %53 = arith.truncf %52 : vector<16x32xf32> to vector<16x32xbf16>
    %c1 = arith.constant 1 : index
    %c0_25 = arith.constant 0 : index
    %c0_26 = arith.constant 0 : index
    %54 = vector.load %arg2[%c1, %c0_25, %c0_26] : memref<2x32x32xbf16, #tpu.memory_space<vmem>>, vector<1x32x32xbf16>
    %55 = vector.shape_cast %54 : vector<1x32x32xbf16> to vector<32x32xbf16>
    %cst_27 = arith.constant dense<0.000000e+00> : vector<16x32xf32>
    %56 = tpu.matmul %53, %55, %cst_27 {dimension_numbers = #tpu.dot_dimension_numbers<[1], [0], [0], [1], [0, 0, 1, 1], [], []>} : vector<16x32xbf16>, vector<32x32xbf16>, vector<16x32xf32> -> vector<16x32xf32>
    %c1_28 = arith.constant 1 : index
    %c0_29 = arith.constant 0 : index
    %c0_30 = arith.constant 0 : index
    %57 = vector.load %arg3[%c1_28, %c0_29, %c0_30] : memref<2x1x32xf32, #tpu.memory_space<vmem>>, vector<1x1x32xf32>
    %58 = vector.shape_cast %57 : vector<1x1x32xf32> to vector<1x32xf32>
    %59 = vector.broadcast %58 : vector<1x32xf32> to vector<16x32xf32>
    %60 = arith.addf %56, %59 : vector<16x32xf32>
    %cst_31 = arith.constant 0.000000e+00 : f32
    %61 = vector.broadcast %cst_31 : f32 to vector<16x32xf32>
    %62 = arith.maximumf %60, %61 : vector<16x32xf32>
    %63 = arith.truncf %62 : vector<16x32xf32> to vector<16x32xbf16>
    %c1_32 = arith.constant 1 : index
    %c0_33 = arith.constant 0 : index
    %c0_34 = arith.constant 0 : index
    %64 = vector.load %arg4[%c1_32, %c0_33, %c0_34] : memref<2x32x32xbf16, #tpu.memory_space<vmem>>, vector<1x32x32xbf16>
    %65 = vector.shape_cast %64 : vector<1x32x32xbf16> to vector<32x32xbf16>
    %cst_35 = arith.constant dense<0.000000e+00> : vector<16x32xf32>
    %66 = tpu.matmul %63, %65, %cst_35 {dimension_numbers = #tpu.dot_dimension_numbers<[1], [0], [0], [1], [0, 0, 1, 1], [], []>} : vector<16x32xbf16>, vector<32x32xbf16>, vector<16x32xf32> -> vector<16x32xf32>
    %c1_36 = arith.constant 1 : index
    %c0_37 = arith.constant 0 : index
    %c0_38 = arith.constant 0 : index
    %67 = vector.load %arg5[%c1_36, %c0_37, %c0_38] : memref<2x1x32xf32, #tpu.memory_space<vmem>>, vector<1x1x32xf32>
    %68 = vector.shape_cast %67 : vector<1x1x32xf32> to vector<1x32xf32>
    %69 = vector.broadcast %68 : vector<1x32xf32> to vector<16x32xf32>
    %70 = arith.addf %66, %69 : vector<16x32xf32>
    %71 = arith.addf %36, %70 : vector<16x32xf32>
    %72 = vector.shape_cast %71 : vector<16x32xf32> to vector<1x16x32xf32>
    %73 = vector.extract_strided_slice %72 {offsets = [0, 0, 0], sizes = [1, 1, 32], strides = [1, 1, 1]} : vector<1x16x32xf32> to vector<1x1x32xf32>
    %74 = vector.shape_cast %73 : vector<1x1x32xf32> to vector<1x32xf32>
    %c0_39 = arith.constant 0 : index
    %c0_40 = arith.constant 0 : index
    %75 = vector.load %arg9[%c0_39, %c0_40] : memref<1x512xf32, #tpu.memory_space<vmem>>, vector<1x32xf32>
    tpu.vector_store %arg9[%c0_39, %c0_40], %74 {strides = array<i32>} : memref<1x512xf32, #tpu.memory_space<vmem>>, vector<1x32xf32>,
    %76 = vector.extract_strided_slice %72 {offsets = [0, 1, 0], sizes = [1, 1, 32], strides = [1, 1, 1]} : vector<1x16x32xf32> to vector<1x1x32xf32>
    %77 = vector.shape_cast %76 : vector<1x1x32xf32> to vector<1x32xf32>
    %c0_41 = arith.constant 0 : index
    %c32 = arith.constant 32 : index
    %78 = vector.load %arg9[%c0_41, %c32] : memref<1x512xf32, #tpu.memory_space<vmem>>, vector<1x32xf32>
    tpu.vector_store %arg9[%c0_41, %c32], %77 {strides = array<i32>} : memref<1x512xf32, #tpu.memory_space<vmem>>, vector<1x32xf32>,
    %79 = vector.extract_strided_slice %72 {offsets = [0, 2, 0], sizes = [1, 1, 32], strides = [1, 1, 1]} : vector<1x16x32xf32> to vector<1x1x32xf32>
    %80 = vector.shape_cast %79 : vector<1x1x32xf32> to vector<1x32xf32>
    %c0_42 = arith.constant 0 : index
    %c64 = arith.constant 64 : index
    %81 = vector.load %arg9[%c0_42, %c64] : memref<1x512xf32, #tpu.memory_space<vmem>>, vector<1x32xf32>
    tpu.vector_store %arg9[%c0_42, %c64], %80 {strides = array<i32>} : memref<1x512xf32, #tpu.memory_space<vmem>>, vector<1x32xf32>,
    %82 = vector.extract_strided_slice %72 {offsets = [0, 3, 0], sizes = [1, 1, 32], strides = [1, 1, 1]} : vector<1x16x32xf32> to vector<1x1x32xf32>
    %83 = vector.shape_cast %82 : vector<1x1x32xf32> to vector<1x32xf32>
    %c0_43 = arith.constant 0 : index
    %c96 = arith.constant 96 : index
    %84 = vector.load %arg9[%c0_43, %c96] : memref<1x512xf32, #tpu.memory_space<vmem>>, vector<1x32xf32>
    tpu.vector_store %arg9[%c0_43, %c96], %83 {strides = array<i32>} : memref<1x512xf32, #tpu.memory_space<vmem>>, vector<1x32xf32>,
    %85 = vector.extract_strided_slice %72 {offsets = [0, 4, 0], sizes = [1, 1, 32], strides = [1, 1, 1]} : vector<1x16x32xf32> to vector<1x1x32xf32>
    %86 = vector.shape_cast %85 : vector<1x1x32xf32> to vector<1x32xf32>
    %c0_44 = arith.constant 0 : index
    %c128 = arith.constant 128 : index
    %87 = vector.load %arg9[%c0_44, %c128] : memref<1x512xf32, #tpu.memory_space<vmem>>, vector<1x32xf32>
    tpu.vector_store %arg9[%c0_44, %c128], %86 {strides = array<i32>} : memref<1x512xf32, #tpu.memory_space<vmem>>, vector<1x32xf32>,
    %88 = vector.extract_strided_slice %72 {offsets = [0, 5, 0], sizes = [1, 1, 32], strides = [1, 1, 1]} : vector<1x16x32xf32> to vector<1x1x32xf32>
    %89 = vector.shape_cast %88 : vector<1x1x32xf32> to vector<1x32xf32>
    %c0_45 = arith.constant 0 : index
    %c160 = arith.constant 160 : index
    %90 = vector.load %arg9[%c0_45, %c160] : memref<1x512xf32, #tpu.memory_space<vmem>>, vector<1x32xf32>
    tpu.vector_store %arg9[%c0_45, %c160], %89 {strides = array<i32>} : memref<1x512xf32, #tpu.memory_space<vmem>>, vector<1x32xf32>,
    %91 = vector.extract_strided_slice %72 {offsets = [0, 6, 0], sizes = [1, 1, 32], strides = [1, 1, 1]} : vector<1x16x32xf32> to vector<1x1x32xf32>
    %92 = vector.shape_cast %91 : vector<1x1x32xf32> to vector<1x32xf32>
    %c0_46 = arith.constant 0 : index
    %c192 = arith.constant 192 : index
    %93 = vector.load %arg9[%c0_46, %c192] : memref<1x512xf32, #tpu.memory_space<vmem>>, vector<1x32xf32>
    tpu.vector_store %arg9[%c0_46, %c192], %92 {strides = array<i32>} : memref<1x512xf32, #tpu.memory_space<vmem>>, vector<1x32xf32>,
    %94 = vector.extract_strided_slice %72 {offsets = [0, 7, 0], sizes = [1, 1, 32], strides = [1, 1, 1]} : vector<1x16x32xf32> to vector<1x1x32xf32>
    %95 = vector.shape_cast %94 : vector<1x1x32xf32> to vector<1x32xf32>
    %c0_47 = arith.constant 0 : index
    %c224 = arith.constant 224 : index
    %96 = vector.load %arg9[%c0_47, %c224] : memref<1x512xf32, #tpu.memory_space<vmem>>, vector<1x32xf32>
    tpu.vector_store %arg9[%c0_47, %c224], %95 {strides = array<i32>} : memref<1x512xf32, #tpu.memory_space<vmem>>, vector<1x32xf32>,
    %97 = vector.extract_strided_slice %72 {offsets = [0, 8, 0], sizes = [1, 1, 32], strides = [1, 1, 1]} : vector<1x16x32xf32> to vector<1x1x32xf32>
    %98 = vector.shape_cast %97 : vector<1x1x32xf32> to vector<1x32xf32>
    %c0_48 = arith.constant 0 : index
    %c256 = arith.constant 256 : index
    %99 = vector.load %arg9[%c0_48, %c256] : memref<1x512xf32, #tpu.memory_space<vmem>>, vector<1x32xf32>
    tpu.vector_store %arg9[%c0_48, %c256], %98 {strides = array<i32>} : memref<1x512xf32, #tpu.memory_space<vmem>>, vector<1x32xf32>,
    %100 = vector.extract_strided_slice %72 {offsets = [0, 9, 0], sizes = [1, 1, 32], strides = [1, 1, 1]} : vector<1x16x32xf32> to vector<1x1x32xf32>
    %101 = vector.shape_cast %100 : vector<1x1x32xf32> to vector<1x32xf32>
    %c0_49 = arith.constant 0 : index
    %c288 = arith.constant 288 : index
    %102 = vector.load %arg9[%c0_49, %c288] : memref<1x512xf32, #tpu.memory_space<vmem>>, vector<1x32xf32>
    tpu.vector_store %arg9[%c0_49, %c288], %101 {strides = array<i32>} : memref<1x512xf32, #tpu.memory_space<vmem>>, vector<1x32xf32>,
    %103 = vector.extract_strided_slice %72 {offsets = [0, 10, 0], sizes = [1, 1, 32], strides = [1, 1, 1]} : vector<1x16x32xf32> to vector<1x1x32xf32>
    %104 = vector.shape_cast %103 : vector<1x1x32xf32> to vector<1x32xf32>
    %c0_50 = arith.constant 0 : index
    %c320 = arith.constant 320 : index
    %105 = vector.load %arg9[%c0_50, %c320] : memref<1x512xf32, #tpu.memory_space<vmem>>, vector<1x32xf32>
    tpu.vector_store %arg9[%c0_50, %c320], %104 {strides = array<i32>} : memref<1x512xf32, #tpu.memory_space<vmem>>, vector<1x32xf32>,
    %106 = vector.extract_strided_slice %72 {offsets = [0, 11, 0], sizes = [1, 1, 32], strides = [1, 1, 1]} : vector<1x16x32xf32> to vector<1x1x32xf32>
    %107 = vector.shape_cast %106 : vector<1x1x32xf32> to vector<1x32xf32>
    %c0_51 = arith.constant 0 : index
    %c352 = arith.constant 352 : index
    %108 = vector.load %arg9[%c0_51, %c352] : memref<1x512xf32, #tpu.memory_space<vmem>>, vector<1x32xf32>
    tpu.vector_store %arg9[%c0_51, %c352], %107 {strides = array<i32>} : memref<1x512xf32, #tpu.memory_space<vmem>>, vector<1x32xf32>,
    %109 = vector.extract_strided_slice %72 {offsets = [0, 12, 0], sizes = [1, 1, 32], strides = [1, 1, 1]} : vector<1x16x32xf32> to vector<1x1x32xf32>
    %110 = vector.shape_cast %109 : vector<1x1x32xf32> to vector<1x32xf32>
    %c0_52 = arith.constant 0 : index
    %c384 = arith.constant 384 : index
    %111 = vector.load %arg9[%c0_52, %c384] : memref<1x512xf32, #tpu.memory_space<vmem>>, vector<1x32xf32>
    tpu.vector_store %arg9[%c0_52, %c384], %110 {strides = array<i32>} : memref<1x512xf32, #tpu.memory_space<vmem>>, vector<1x32xf32>,
    %112 = vector.extract_strided_slice %72 {offsets = [0, 13, 0], sizes = [1, 1, 32], strides = [1, 1, 1]} : vector<1x16x32xf32> to vector<1x1x32xf32>
    %113 = vector.shape_cast %112 : vector<1x1x32xf32> to vector<1x32xf32>
    %c0_53 = arith.constant 0 : index
    %c416 = arith.constant 416 : index
    %114 = vector.load %arg9[%c0_53, %c416] : memref<1x512xf32, #tpu.memory_space<vmem>>, vector<1x32xf32>
    tpu.vector_store %arg9[%c0_53, %c416], %113 {strides = array<i32>} : memref<1x512xf32, #tpu.memory_space<vmem>>, vector<1x32xf32>,
    %115 = vector.extract_strided_slice %72 {offsets = [0, 14, 0], sizes = [1, 1, 32], strides = [1, 1, 1]} : vector<1x16x32xf32> to vector<1x1x32xf32>
    %116 = vector.shape_cast %115 : vector<1x1x32xf32> to vector<1x32xf32>
    %c0_54 = arith.constant 0 : index
    %c448 = arith.constant 448 : index
    %117 = vector.load %arg9[%c0_54, %c448] : memref<1x512xf32, #tpu.memory_space<vmem>>, vector<1x32xf32>
    tpu.vector_store %arg9[%c0_54, %c448], %116 {strides = array<i32>} : memref<1x512xf32, #tpu.memory_space<vmem>>, vector<1x32xf32>,
    %118 = vector.extract_strided_slice %72 {offsets = [0, 15, 0], sizes = [1, 1, 32], strides = [1, 1, 1]} : vector<1x16x32xf32> to vector<1x1x32xf32>
    %119 = vector.shape_cast %118 : vector<1x1x32xf32> to vector<1x32xf32>
    %c0_55 = arith.constant 0 : index
    %c480 = arith.constant 480 : index
    %120 = vector.load %arg9[%c0_55, %c480] : memref<1x512xf32, #tpu.memory_space<vmem>>, vector<1x32xf32>
    tpu.vector_store %arg9[%c0_55, %c480], %119 {strides = array<i32>} : memref<1x512xf32, #tpu.memory_space<vmem>>, vector<1x32xf32>,
    %c0_56 = arith.constant 0 : index
    %c0_57 = arith.constant 0 : index
    %121 = vector.load %arg9[%c0_56, %c0_57] : memref<1x512xf32, #tpu.memory_space<vmem>>, vector<1x512xf32>
    %122 = arith.truncf %121 : vector<1x512xf32> to vector<1x512xbf16>
    %c0_58 = arith.constant 0 : index
    %c0_59 = arith.constant 0 : index
    %123 = vector.load %arg6[%c0_58, %c0_59] : memref<512x256xbf16, #tpu.memory_space<vmem>>, vector<512x256xbf16>
    %cst_60 = arith.constant dense<0.000000e+00> : vector<1x256xf32>
    %124 = tpu.matmul %122, %123, %cst_60 {dimension_numbers = #tpu.dot_dimension_numbers<[1], [0], [0], [1], [0, 0, 1, 1], [], []>} : vector<1x512xbf16>, vector<512x256xbf16>, vector<1x256xf32> -> vector<1x256xf32>
    %c0_61 = arith.constant 0 : index
    %c0_62 = arith.constant 0 : index
    %125 = vector.load %arg7[%c0_61, %c0_62] : memref<1x256xf32, #tpu.memory_space<vmem>>, vector<1x256xf32>
    %126 = arith.addf %124, %125 : vector<1x256xf32>
    %127 = arith.mulf %126, %126 : vector<1x256xf32>
    %cst_63 = arith.constant dense<0.000000e+00> : vector<1xf32>
    %128 = vector.multi_reduction <add>, %127, %cst_63 [1] : vector<1x256xf32> to vector<1xf32>
    %129 = vector.shape_cast %128 : vector<1xf32> to vector<1x1xf32>
    %cst_64 = arith.constant 1.000000e-24 : f32
    %130 = vector.broadcast %cst_64 : f32 to vector<1x1xf32>
    %131 = arith.maximumf %129, %130 : vector<1x1xf32>
    %132 = math.rsqrt %131 : vector<1x1xf32>
    %133 = vector.broadcast %132 : vector<1x1xf32> to vector<1x256xf32>
    %134 = arith.mulf %126, %133 : vector<1x256xf32>
    %c0_65 = arith.constant 0 : index
    %c0_66 = arith.constant 0 : index
    %c0_67 = arith.constant 0 : index
    %135 = vector.load %arg8[%c0_65, %c0_66, %c0_67] : memref<1x1x256xf32, #tpu.memory_space<vmem>>, vector<1x1x256xf32>
    %136 = vector.shape_cast %135 : vector<1x1x256xf32> to vector<1x256xf32>
    %137 = vector.shape_cast %134 : vector<1x256xf32> to vector<1x1x256xf32>
    tpu.vector_store %arg8[%c0_65, %c0_66, %c0_67], %137 {strides = array<i32>} : memref<1x1x256xf32, #tpu.memory_space<vmem>>, vector<1x1x256xf32>,
    return
  }
  func.func @transform_0(%arg0: i32) -> (i32, i32) {
    %c0_i32 = arith.constant 0 : i32
    %c0_i32_0 = arith.constant 0 : i32
    return %arg0, %c0_i32 : i32, i32
  }
  func.func @transform_1(%arg0: i32) -> (i32, i32, i32) {
    %c0_i32 = arith.constant 0 : i32
    %c0_i32_0 = arith.constant 0 : i32
    %c0_i32_1 = arith.constant 0 : i32
    %c0_i32_2 = arith.constant 0 : i32
    return %c0_i32, %c0_i32_0, %c0_i32_1 : i32, i32, i32
  }
  func.func @transform_2(%arg0: i32) -> (i32, i32, i32) {
    %c0_i32 = arith.constant 0 : i32
    %c0_i32_0 = arith.constant 0 : i32
    %c0_i32_1 = arith.constant 0 : i32
    %c0_i32_2 = arith.constant 0 : i32
    return %c0_i32, %c0_i32_0, %c0_i32_1 : i32, i32, i32
  }
  func.func @transform_3(%arg0: i32) -> (i32, i32, i32) {
    %c0_i32 = arith.constant 0 : i32
    %c0_i32_0 = arith.constant 0 : i32
    %c0_i32_1 = arith.constant 0 : i32
    %c0_i32_2 = arith.constant 0 : i32
    return %c0_i32, %c0_i32_0, %c0_i32_1 : i32, i32, i32
  }
  func.func @transform_4(%arg0: i32) -> (i32, i32, i32) {
    %c0_i32 = arith.constant 0 : i32
    %c0_i32_0 = arith.constant 0 : i32
    %c0_i32_1 = arith.constant 0 : i32
    %c0_i32_2 = arith.constant 0 : i32
    return %c0_i32, %c0_i32_0, %c0_i32_1 : i32, i32, i32
  }
  func.func @transform_5(%arg0: i32) -> (i32, i32) {
    %c0_i32 = arith.constant 0 : i32
    %c0_i32_0 = arith.constant 0 : i32
    %c0_i32_1 = arith.constant 0 : i32
    return %c0_i32, %c0_i32_0 : i32, i32
  }
  func.func @transform_6(%arg0: i32) -> (i32, i32) {
    %c0_i32 = arith.constant 0 : i32
    %c0_i32_0 = arith.constant 0 : i32
    %c0_i32_1 = arith.constant 0 : i32
    return %c0_i32, %c0_i32_0 : i32, i32
  }
  func.func @transform_7(%arg0: i32) -> (i32, i32, i32) {
    %c0_i32 = arith.constant 0 : i32
    %c0_i32_0 = arith.constant 0 : i32
    %c0_i32_1 = arith.constant 0 : i32
    return %arg0, %c0_i32, %c0_i32_0 : i32, i32, i32
  }
}

</mosaic_0001>

<llo_original>
// kernel: tpu_custom_call.1
$region0: #{tpu_custom_call.1}
  #allocation0 [shape = 'u32[]', space=smem, size = 0x4, offset = 0x4, fixed_abs, tag = 'smem constant byte address 0x4 - core index']
  #allocation1 [shape = 'u32[72,128]{1,0:T(1,128)}', space=vmem, size = 0x9000, scoped, tag = 'internal scratch']
  #allocation2 [shape = 'f32[1,512]{1,0:T(1,128)}', space=vmem, size = 0x800, scoped, tag = 'scratch operand']
  %s0 = inlined_call_operand.hbm [shape: bf16[32,32], index: 0, kind: input, shape index: {}]
  %s1 = inlined_call_operand.hbm [shape: bf16[2,32,32], index: 1, kind: input, shape index: {}]
  %s2 = inlined_call_operand.hbm [shape: f32[2,1,32], index: 2, kind: input, shape index: {}]
  %s3 = inlined_call_operand.hbm [shape: bf16[2,32,32], index: 3, kind: input, shape index: {}]
  %s4 = inlined_call_operand.vmem [shape: f32[2,1,32], index: 4, kind: input, shape index: {}]
  %s5 = inlined_call_operand.hbm [shape: bf16[512,256], index: 5, kind: input, shape index: {}]
  %s6 = inlined_call_operand.vmem [shape: f32[1,256], index: 6, kind: input, shape index: {}]
  %s7 = inlined_call_operand.hbm [shape: f32[2,1,256], index: 7, kind: output, shape index: {}]
  %s8 = sld [smem:[#allocation0]]
  $region81: #{tpu_custom_call.1} parent=0
    _
  %s10 = ssub.s32 1, %s8
  %s11 = scalar_select 0, %s10, %s8
  $region1: #{tpu_custom_call.1} parent=0
    #allocation3 [shape = 'u8[8192]{0}', space=vmem, size = 0x2000, scoped, tag = 'input window, operand 0']
    #allocation4 [shape = 's32[2]{0}', space=sflag, size = 0x8, scoped, tag = 'scoped memory for tpu_custom_call.1']
    #allocation5 [shape = 's32[2]{0}', space=sflag, size = 0x8, scoped, tag = 'scoped memory for tpu_custom_call.1']
    #allocation6 [shape = 'u8[16384]{0}', space=vmem, size = 0x4000, scoped, tag = 'input window, operand 1, single buffered']
    #allocation7 [shape = 's32[1]{0}', space=sflag, size = 0x4, scoped, tag = 'scoped memory for tpu_custom_call.1']
    #allocation8 [shape = 'u8[1024]{0}', space=vmem, size = 0x400, scoped, tag = 'input window, operand 2, single buffered']
    #allocation9 [shape = 'u8[16384]{0}', space=vmem, size = 0x4000, scoped, tag = 'input window, operand 3, single buffered']
    #allocation10 [shape = 's32[1]{0}', space=sflag, size = 0x4, scoped, tag = 'scoped memory for tpu_custom_call.1']
    #allocation11 [shape = 'u8[262144]{0}', space=vmem, size = 0x40000, scoped, tag = 'input window, operand 5, single buffered']
    #allocation12 [shape = 'u8[2048]{0}', space=vmem, size = 0x800, scoped, tag = 'output window, operand 0']
    %12 = vsyncpa [#allocation4], 0
    %s13 = scalar_lea.sflag [#allocation4], 1
    %14 = vsyncpa %s13, 0
    %15 = vsyncpa [#allocation7], 0
    %16 = vsyncpa [#allocation10], 0
    %17 = vsyncpa [#allocation5], 0
    %s18 = scalar_lea.sflag [#allocation5], 1
    %19 = vsyncpa %s18, 0
    loop: start=0, step=1, limit=4
    $region2: #{tpu_custom_call.1} parent=1 // loop_pre_header
      _
    $region3: #{tpu_custom_call.1} parent=1 // loop_header
      %s21 = sphi 0, %s25
      %p22 = scmp.ge.s32.totalorder %s21, 4
      %s31 = sphi 0, %s33
      %s34 = sphi 0, %s31
      %s35 = sphi 0, %s34
      %s51 = sphi 0, %s35
      %s55 = sphi 0, %s55
      %s57 = sphi 0, %s55
      %s58 = sphi 0, %s57
      %s72 = sphi 0, %s58
      %s76 = sphi 0, %s76
      %s78 = sphi 0, %s76
      %s79 = sphi 0, %s78
      %s93 = sphi 0, %s79
      %s97 = sphi 0, %s97
      %s99 = sphi 0, %s97
      %s100 = sphi 0, %s99
      %s114 = sphi 0, %s100
      %s118 = sphi 0, %s118
      %s120 = sphi 0, %s118
      %s121 = sphi 0, %s120
      %s135 = sphi 0, %s121
      %s139 = sphi 0, %s139
      %s141 = sphi 0, %s139
      %s142 = sphi 0, %s141
      %s156 = sphi 0, %s142
      %s160 = sphi 0, %s160
      %s162 = sphi 0, %s160
      %s163 = sphi 0, %s162
      %s177 = sphi 0, %s163
      %s183 = sphi 0, %s185
      %s186 = sphi 0, %s183
      %s187 = sphi 0, %s186
      %s203 = sphi 0, %s187
    $region4: #{tpu_custom_call.1} parent=1 // loop_header_branch
      %24 = sbr.rel (%p22) target = $region8
    $region5: #{tpu_custom_call.1} parent=1 // loop_body
      %s26 = ssub.s32 %s21, 1
      %s27 = ssub.s32 %s21, 2
      %s28 = sadd.s32 %s21, 1
      %s29 = ssub.s32 %s21, %s28
      %p30 = scmp.eq.s32.totalorder %s29, 0
      %s32 = sadd.s32 %s31, 1
      %s33 = scalar_select %p30, %s31, %s32
      %p36 = pneg %p30
      %p37 = scmp.eq.s32.totalorder %s21, 1
      %p38 = por %p36, %p37
      %p39 = scmp.ne.s32.totalorder %s31, %s34
      %p40 = scmp.eq.s32.totalorder %s21, 0
      %p41 = por %p39, %p40
      %p42 = scmp.ne.s32.totalorder %s31, %s34
      %p43 = scmp.eq.s32.totalorder %s26, 1
      %p44 = por %p42, %p43
      %p45 = scmp.ne.s32.totalorder %s34, %s35
      %p46 = scmp.eq.s32.totalorder %s26, 0
      %p47 = por %p45, %p46
      %p48 = scmp.ne.s32.totalorder %s34, %s35
      %p49 = scmp.eq.s32.totalorder %s27, 1
      %p50 = por %p48, %p49
      %p52 = scmp.ne.s32.totalorder %s35, %s51
      %p53 = scmp.eq.s32.totalorder %s27, 0
      %p54 = por %p52, %p53
      %s56 = sadd.s32 %s55, 1
      %p59 = scmp.eq.s32.totalorder %s21, 1
      %p60 = scmp.ne.s32.totalorder %s55, %s57
      %p61 = scmp.eq.s32.totalorder %s21, 0
      %p62 = por %p60, %p61
      %p63 = scmp.ne.s32.totalorder %s55, %s57
      %p64 = scmp.eq.s32.totalorder %s26, 1
      %p65 = por %p63, %p64
      %p66 = scmp.ne.s32.totalorder %s57, %s58
      %p67 = scmp.eq.s32.totalorder %s26, 0
      %p68 = por %p66, %p67
      %p69 = scmp.ne.s32.totalorder %s57, %s58
      %p70 = scmp.eq.s32.totalorder %s27, 1
      %p71 = por %p69, %p70
      %p73 = scmp.ne.s32.totalorder %s58, %s72
      %p74 = scmp.eq.s32.totalorder %s27, 0
      %p75 = por %p73, %p74
      %s77 = sadd.s32 %s76, 1
      %p80 = scmp.eq.s32.totalorder %s21, 1
      %p81 = scmp.ne.s32.totalorder %s76, %s78
      %p82 = scmp.eq.s32.totalorder %s21, 0
      %p83 = por %p81, %p82
      %p84 = scmp.ne.s32.totalorder %s76, %s78
      %p85 = scmp.eq.s32.totalorder %s26, 1
      %p86 = por %p84, %p85
      %p87 = scmp.ne.s32.totalorder %s78, %s79
      %p88 = scmp.eq.s32.totalorder %s26, 0
      %p89 = por %p87, %p88
      %p90 = scmp.ne.s32.totalorder %s78, %s79
      %p91 = scmp.eq.s32.totalorder %s27, 1
      %p92 = por %p90, %p91
      %p94 = scmp.ne.s32.totalorder %s79, %s93
      %p95 = scmp.eq.s32.totalorder %s27, 0
      %p96 = por %p94, %p95
      %s98 = sadd.s32 %s97, 1
      %p101 = scmp.eq.s32.totalorder %s21, 1
      %p102 = scmp.ne.s32.totalorder %s97, %s99
      %p103 = scmp.eq.s32.totalorder %s21, 0
      %p104 = por %p102, %p103
      %p105 = scmp.ne.s32.totalorder %s97, %s99
      %p106 = scmp.eq.s32.totalorder %s26, 1
      %p107 = por %p105, %p106
      %p108 = scmp.ne.s32.totalorder %s99, %s100
      %p109 = scmp.eq.s32.totalorder %s26, 0
      %p110 = por %p108, %p109
      %p111 = scmp.ne.s32.totalorder %s99, %s100
      %p112 = scmp.eq.s32.totalorder %s27, 1
      %p113 = por %p111, %p112
      %p115 = scmp.ne.s32.totalorder %s100, %s114
      %p116 = scmp.eq.s32.totalorder %s27, 0
      %p117 = por %p115, %p116
      %s119 = sadd.s32 %s118, 1
      %p122 = scmp.eq.s32.totalorder %s21, 1
      %p123 = scmp.ne.s32.totalorder %s118, %s120
      %p124 = scmp.eq.s32.totalorder %s21, 0
      %p125 = por %p123, %p124
      %p126 = scmp.ne.s32.totalorder %s118, %s120
      %p127 = scmp.eq.s32.totalorder %s26, 1
      %p128 = por %p126, %p127
      %p129 = scmp.ne.s32.totalorder %s120, %s121
      %p130 = scmp.eq.s32.totalorder %s26, 0
      %p131 = por %p129, %p130
      %p132 = scmp.ne.s32.totalorder %s120, %s121
      %p133 = scmp.eq.s32.totalorder %s27, 1
      %p134 = por %p132, %p133
      %p136 = scmp.ne.s32.totalorder %s121, %s135
      %p137 = scmp.eq.s32.totalorder %s27, 0
      %p138 = por %p136, %p137
      %s140 = sadd.s32 %s139, 1
      %p143 = scmp.eq.s32.totalorder %s21, 1
      %p144 = scmp.ne.s32.totalorder %s139, %s141
      %p145 = scmp.eq.s32.totalorder %s21, 0
      %p146 = por %p144, %p145
      %p147 = scmp.ne.s32.totalorder %s139, %s141
      %p148 = scmp.eq.s32.totalorder %s26, 1
      %p149 = por %p147, %p148
      %p150 = scmp.ne.s32.totalorder %s141, %s142
      %p151 = scmp.eq.s32.totalorder %s26, 0
      %p152 = por %p150, %p151
      %p153 = scmp.ne.s32.totalorder %s141, %s142
      %p154 = scmp.eq.s32.totalorder %s27, 1
      %p155 = por %p153, %p154
      %p157 = scmp.ne.s32.totalorder %s142, %s156
      %p158 = scmp.eq.s32.totalorder %s27, 0
      %p159 = por %p157, %p158
      %s161 = sadd.s32 %s160, 1
      %p164 = scmp.eq.s32.totalorder %s21, 1
      %p165 = scmp.ne.s32.totalorder %s160, %s162
      %p166 = scmp.eq.s32.totalorder %s21, 0
      %p167 = por %p165, %p166
      %p168 = scmp.ne.s32.totalorder %s160, %s162
      %p169 = scmp.eq.s32.totalorder %s26, 1
      %p170 = por %p168, %p169
      %p171 = scmp.ne.s32.totalorder %s162, %s163
      %p172 = scmp.eq.s32.totalorder %s26, 0
      %p173 = por %p171, %p172
      %p174 = scmp.ne.s32.totalorder %s162, %s163
      %p175 = scmp.eq.s32.totalorder %s27, 1
      %p176 = por %p174, %p175
      %p178 = scmp.ne.s32.totalorder %s163, %s177
      %p179 = scmp.eq.s32.totalorder %s27, 0
      %p180 = por %p178, %p179
      %s181 = ssub.s32 %s21, %s28
      %p182 = scmp.eq.s32.totalorder %s181, 0
      %s184 = sadd.s32 %s183, 1
      %s185 = scalar_select %p182, %s183, %s184
      %p188 = pneg %p182
      %p189 = scmp.eq.s32.totalorder %s21, 1
      %p190 = por %p188, %p189
      %p191 = scmp.ne.s32.totalorder %s183, %s186
      %p192 = scmp.eq.s32.totalorder %s21, 0
      %p193 = por %p191, %p192
      %p194 = scmp.ne.s32.totalorder %s183, %s186
      %p195 = scmp.eq.s32.totalorder %s26, 1
      %p196 = por %p194, %p195
      %p197 = scmp.ne.s32.totalorder %s186, %s187
      %p198 = scmp.eq.s32.totalorder %s26, 0
      %p199 = por %p197, %p198
      %p200 = scmp.ne.s32.totalorder %s186, %s187
      %p201 = scmp.eq.s32.totalorder %s27, 1
      %p202 = por %p200, %p201
      %p204 = scmp.ne.s32.totalorder %s187, %s203
      %p205 = scmp.eq.s32.totalorder %s27, 0
      %p206 = por %p204, %p205
      %p207 = scmp.le.s32.totalorder 1, %s21
      %p208 = scmp.lt.s32.totalorder %s21, 3
      %p209 = pnand %p207, %p208
      %p210 = pneg %p209
      // Predicated region
      $region9: #{tpu_custom_call.1} parent=5 // pred_check
        _
      $region10: #{tpu_custom_call.1} parent=5 // pred_check_branch
        %212 = sbr.rel (%p209) target = $region12
      $region11: #{tpu_custom_call.1} parent=5 // pred_region
        %s213 = ssub.s32 %s21, 1
        // Predicated region
        $region13: #{tpu_custom_call.1} parent=11 // pred_check
          %p214 = pneg %p68
        $region14: #{tpu_custom_call.1} parent=11 // pred_check_branch
          %216 = sbr.rel (%p214) target = $region16
        $region15: #{tpu_custom_call.1} parent=11 // pred_region
          %218 = vsyncadd [#allocation7], 0
          %s219 = sshll.u32 %s1, 4
          %s220 = int_to_ptr.hbm [resolvable:$true] %s219
          %s221 = sshll.u32 [#allocation6], 4
          %s222 = int_to_ptr.vmem [resolvable:$true] %s221
          %227 = dma.hbm_to_vmem [thread:$0]  %s220, 512, %s222, [#allocation7], 64, 64, 4
        $region16: #{tpu_custom_call.1} parent=11 // pred_fallthru
          _
        // Predicated region
        $region17: #{tpu_custom_call.1} parent=11 // pred_check
          %p228 = pneg %p89
        $region18: #{tpu_custom_call.1} parent=11 // pred_check_branch
          %230 = sbr.rel (%p228) target = $region20
        $region19: #{tpu_custom_call.1} parent=11 // pred_region
          %232 = vsyncadd [#allocation7], 0
          %s233 = sshll.u32 %s2, 4
          %s234 = int_to_ptr.hbm [resolvable:$true] %s233
          %s235 = sshll.u32 [#allocation8], 4
          %s236 = int_to_ptr.vmem [resolvable:$true] %s235
          %241 = dma.hbm_to_vmem [thread:$0]  %s234, 32, %s236, [#allocation7], 16, 16, 1
        $region20: #{tpu_custom_call.1} parent=11 // pred_fallthru
          _
        // Predicated region
        $region21: #{tpu_custom_call.1} parent=11 // pred_check
          %p242 = pneg %p110
        $region22: #{tpu_custom_call.1} parent=11 // pred_check_branch
          %244 = sbr.rel (%p242) target = $region24
        $region23: #{tpu_custom_call.1} parent=11 // pred_region
          %246 = vsyncadd [#allocation10], 0
          %s247 = sshll.u32 %s3, 4
          %s248 = int_to_ptr.hbm [resolvable:$true] %s247
          %s249 = sshll.u32 [#allocation9], 4
          %s250 = int_to_ptr.vmem [resolvable:$true] %s249
          %255 = dma.hbm_to_vmem [thread:$0]  %s248, 512, %s250, [#allocation10], 64, 64, 4
        $region24: #{tpu_custom_call.1} parent=11 // pred_fallthru
          _
        // Predicated region
        $region25: #{tpu_custom_call.1} parent=11 // pred_check
          %p256 = pneg %p131
        $region26: #{tpu_custom_call.1} parent=11 // pred_check_branch
          %258 = sbr.rel (%p256) target = $region28
        $region27: #{tpu_custom_call.1} parent=11 // pred_region
          _
        $region28: #{tpu_custom_call.1} parent=11 // pred_fallthru
          _
        // Predicated region
        $region29: #{tpu_custom_call.1} parent=11 // pred_check
          %p259 = pneg %p152
        $region30: #{tpu_custom_call.1} parent=11 // pred_check_branch
          %261 = sbr.rel (%p259) target = $region32
        $region31: #{tpu_custom_call.1} parent=11 // pred_region
          %263 = vsyncadd [#allocation10], 0
          %s264 = sshll.u32 %s5, 4
          %s265 = int_to_ptr.hbm [resolvable:$true] %s264
          %s266 = sshll.u32 [#allocation11], 4
          %s267 = int_to_ptr.vmem [resolvable:$true] %s266
          %272 = dma.hbm_to_vmem [thread:$0]  %s265, 8192, %s267, [#allocation10], 128, 128, 8
        $region32: #{tpu_custom_call.1} parent=11 // pred_fallthru
          _
        // Predicated region
        $region33: #{tpu_custom_call.1} parent=11 // pred_check
          %p273 = pneg %p173
        $region34: #{tpu_custom_call.1} parent=11 // pred_check_branch
          %275 = sbr.rel (%p273) target = $region36
        $region35: #{tpu_custom_call.1} parent=11 // pred_region
          _
        $region36: #{tpu_custom_call.1} parent=11 // pred_fallthru
          _
      $region12: #{tpu_custom_call.1} parent=5 // pred_fallthru
        _
      %p276 = scmp.lt.s32.totalorder %s21, 2
      // Predicated region
      $region37: #{tpu_custom_call.1} parent=5 // pred_check
        %p277 = pneg %p276
      $region38: #{tpu_custom_call.1} parent=5 // pred_check_branch
        %279 = sbr.rel (%p277) target = $region40
      $region39: #{tpu_custom_call.1} parent=5 // pred_region
        // Predicated region
        $region41: #{tpu_custom_call.1} parent=39 // pred_check
          %p280 = pneg %p41
        $region42: #{tpu_custom_call.1} parent=39 // pred_check_branch
          %282 = sbr.rel (%p280) target = $region44
        $region43: #{tpu_custom_call.1} parent=39 // pred_region
          %s283 = sand.u32 %s31, 1
          %s284 = scalar_lea.sflag [#allocation4], %s283
          %s285 = sand.u32 %s31, 1
          %s286 = smul.addr %s285, 8
          %s287 = scalar_lea.vmem [#allocation3], %s286
          %s288 = smul.u32 2, %s21
          %290 = vsyncadd %s284, 0
          %s291 = smul.addr %s288, 4
          %s292 = scalar_lea.hbm %s0, %s291
          %s293 = sshll.u32 %s292, 4
          %s294 = int_to_ptr.hbm [resolvable:$true] %s293
          %s295 = sshll.u32 %s287, 4
          %s296 = int_to_ptr.vmem [resolvable:$true] %s295
          %301 = dma.hbm_to_vmem [thread:$0]  %s294, 128, %s296, %s284, 64, 64, 4
        $region44: #{tpu_custom_call.1} parent=39 // pred_fallthru
          _
      $region40: #{tpu_custom_call.1} parent=5 // pred_fallthru
        _
      %p302 = scmp.le.s32.totalorder 1, %s21
      %p303 = scmp.lt.s32.totalorder %s21, 3
      %p304 = pnand %p302, %p303
      %p305 = pneg %p304
      // Predicated region
      $region45: #{tpu_custom_call.1} parent=5 // pred_check
        _
      $region46: #{tpu_custom_call.1} parent=5 // pred_check_branch
        %307 = sbr.rel (%p304) target = $region48
      $region47: #{tpu_custom_call.1} parent=5 // pred_region
        %s308 = ssub.s32 %s21, 1
        %s309 = sand.u32 %s34, 1
        %s310 = scalar_lea.sflag [#allocation4], %s309
        %s311 = sand.u32 %s34, 1
        %s312 = smul.addr %s311, 8
        %s313 = scalar_lea.vmem [#allocation3], %s312
        // Predicated region
        $region49: #{tpu_custom_call.1} parent=47 // pred_check
          %p314 = pneg %p47
        $region50: #{tpu_custom_call.1} parent=47 // pred_check_branch
          %316 = sbr.rel (%p314) target = $region52
        $region51: #{tpu_custom_call.1} parent=47 // pred_region
          %318 = dma.done %s310, 128
        $region52: #{tpu_custom_call.1} parent=47 // pred_fallthru
          _
        // Predicated region
        $region53: #{tpu_custom_call.1} parent=47 // pred_check
          %p319 = pneg %p68
        $region54: #{tpu_custom_call.1} parent=47 // pred_check_branch
          %321 = sbr.rel (%p319) target = $region56
        $region55: #{tpu_custom_call.1} parent=47 // pred_region
          %323 = dma.done [#allocation7], 512
        $region56: #{tpu_custom_call.1} parent=47 // pred_fallthru
          _
        // Predicated region
        $region57: #{tpu_custom_call.1} parent=47 // pred_check
          %p324 = pneg %p89
        $region58: #{tpu_custom_call.1} parent=47 // pred_check_branch
          %326 = sbr.rel (%p324) target = $region60
        $region59: #{tpu_custom_call.1} parent=47 // pred_region
          %328 = dma.done [#allocation7], 32
        $region60: #{tpu_custom_call.1} parent=47 // pred_fallthru
          _
        // Predicated region
        $region61: #{tpu_custom_call.1} parent=47 // pred_check
          %p329 = pneg %p110
        $region62: #{tpu_custom_call.1} parent=47 // pred_check_branch
          %331 = sbr.rel (%p329) target = $region64
        $region63: #{tpu_custom_call.1} parent=47 // pred_region
          %333 = dma.done [#allocation10], 512
        $region64: #{tpu_custom_call.1} parent=47 // pred_fallthru
          _
        // Predicated region
        $region65: #{tpu_custom_call.1} parent=47 // pred_check
          %p334 = pneg %p152
        $region66: #{tpu_custom_call.1} parent=47 // pred_check_branch
          %336 = sbr.rel (%p334) target = $region68
        $region67: #{tpu_custom_call.1} parent=47 // pred_region
          %338 = dma.done [#allocation10], 8192
        $region68: #{tpu_custom_call.1} parent=47 // pred_fallthru
          _
        %s339 = sand.u32 %s34, 1
        %s340 = scalar_lea.sflag [#allocation4], %s339
        %s341 = sand.u32 %s34, 1
        %s342 = smul.addr %s341, 8
        %s343 = scalar_lea.vmem [#allocation3], %s342
        %p344 = pneg %p47
        %p345 = pneg %p44
        %p346 = pneg %p68
        %p347 = pneg %p65
        %p348 = pneg %p89
        %p349 = pneg %p86
        %p350 = pneg %p110
        %p351 = pneg %p107
        %p352 = pneg %p131
        %p353 = pneg %p128
        %p354 = pneg %p152
        %p355 = pneg %p149
        %p356 = pneg %p173
        %p357 = pneg %p170
        %p358 = pneg %p199
        %p359 = pneg %p196
        %s360 = sand.u32 %s186, 1
        %s361 = scalar_lea.sflag [#allocation5], %s360
        %s362 = sand.u32 %s186, 1
        %s363 = smul.addr %s362, 2
        %s364 = scalar_lea.vmem [#allocation12], %s363
        %s365 = smul.u32 2, %s26
        %v367 = vld [vmem:[%s313] sm:$0xf]
        %v368 = vld [vmem:[%s313 + $0x4] sm:$0xf]
        %v369 = vunpack.c.l.bf16 %v367
        %v370 = vunpack.c.l.bf16 %v368
        %vm371 = vcmask 261120
        %v372 = vsel %vm371, %v369, 0.0
        %373 = vadd.xlane.f32.xlu0 %v372
        %v374 = vpop.xlane.xlu0 %373
        %v375 = vsel %vm371, %v370, 0.0
        %376 = vadd.xlane.f32.xlu0 %v375
        %v377 = vpop.xlane.xlu0 %376
        %v378 = vmul.f32 %v374, 0.03125
        %v379 = vmul.f32 %v377, 0.03125
        %v380 = vsub.f32 %v369, %v378
        %v381 = vsub.f32 %v370, %v379
        %v382 = vmul.f32 %v380, %v380
        %v383 = vmul.f32 %v381, %v381
        %v384 = vsel %vm371, %v382, 0.0
        %385 = vadd.xlane.f32.xlu0 %v384
        %v386 = vpop.xlane.xlu0 %385
        %v387 = vsel %vm371, %v383, 0.0
        %388 = vadd.xlane.f32.xlu0 %v387
        %v389 = vpop.xlane.xlu0 %388
        %v390 = vmul.f32 %v386, 0.03125
        %v391 = vmul.f32 %v389, 0.03125
        %v392 = vadd.f32 %v390, 1e-05
        %v393 = vadd.f32 %v391, 1e-05
        %v394 = vrsqrt.pop %v392
        %v395 = vmul.f32 %v394, %v392
        %v396 = vmul.f32 %v395, %v394
        %v397 = vmul.f32 0.5, %v396
        %v398 = vsub.f32 1.5, %v397
        %v399 = vmul.f32 %v394, %v398
        %vm400 = vweird.f32 %v392
        %vm401 = vweird.f32 %v394
        %vm402 = vmor %vm400, %vm401
        %v403 = vsel %vm402, %v394, %v399
        %v404 = vrsqrt.pop %v393
        %v405 = vmul.f32 %v404, %v393
        %v406 = vmul.f32 %v405, %v404
        %v407 = vmul.f32 0.5, %v406
        %v408 = vsub.f32 1.5, %v407
        %v409 = vmul.f32 %v404, %v408
        %vm410 = vweird.f32 %v393
        %vm411 = vweird.f32 %v404
        %vm412 = vmor %vm410, %vm411
        %v413 = vsel %vm412, %v404, %v409
        %v414 = vmul.f32 %v380, %v403
        %v415 = vmul.f32 %v381, %v413
        %v416 = vpack.c.bf16 %v415, %v414
        %v417 = vld [vmem:[#allocation6] sm:$0xf]
        %v418 = vld [vmem:[#allocation6 + $0x4] sm:$0xf]
        %v419 = vld [vmem:[#allocation6 + $0x8] sm:$0xf]
        %v420 = vld [vmem:[#allocation6 + $0xc] sm:$0xf]
        %v421 = vld [vmem:[#allocation8] sm:$0x1]
        %v423 = vperm.slane %v421, 0
        %v429 = vunpack.c.l.b16 %v417
        %v430 = vunpack.c.l.b16 %v418
        %v431 = vunpack.c.l.b16 %v419
        %v432 = vunpack.c.l.b16 %v420
        %v433 = vpack.c.b16 %v430, %v429
        %v434 = vpack.c.b16 %v432, %v431
        %v438 = vsel %vm371, %v416, 0
        %440 = vmatpush.bf16.msra.mxu0 0
        %441 = vmatpush.bf16.msra.mxu0 0
        %442 = vmatpush.bf16.msra.mxu0 0
        %443 = vmatpush.bf16.msra.mxu0 0
        %444 = vmatpush.bf16.msra.mxu0 0
        %445 = vmatpush.bf16.msra.mxu0 0
        %446 = vmatpush.bf16.msra.mxu0 %v434
        %447 = vmatpush.bf16.msra.mxu0 %v433
        %448 = vmatmul.bf16.gmra.mxu0 %v438
        %v449 = vpop.f32.mrf.mxu0
        %v450 = vadd.f32 %v423, %v449
        %v451 = vpop.f32.mrf.mxu0
        %v452 = vadd.f32 %v423, %v451
        %453 = vdwg.mxu0
        %v454 = vmax.f32 %v450, 0.0
        %v455 = vmax.f32 %v452, 0.0
        %v456 = vpack.c.bf16 %v455, %v454
        %v457 = vld [vmem:[#allocation9] sm:$0xf]
        %v458 = vld [vmem:[#allocation9 + $0x4] sm:$0xf]
        %v459 = vld [vmem:[#allocation9 + $0x8] sm:$0xf]
        %v460 = vld [vmem:[#allocation9 + $0xc] sm:$0xf]
        %v461 = vld [vmem:[%s4] sm:$0x1]
        %v463 = vperm.slane %v461, 0
        %v469 = vunpack.c.l.b16 %v457
        %v470 = vunpack.c.l.b16 %v458
        %v471 = vunpack.c.l.b16 %v459
        %v472 = vunpack.c.l.b16 %v460
        %v473 = vpack.c.b16 %v470, %v469
        %v474 = vpack.c.b16 %v472, %v471
        %v478 = vsel %vm371, %v456, 0
        %480 = vmatpush.bf16.msra.mxu0 0
        %481 = vmatpush.bf16.msra.mxu0 0
        %482 = vmatpush.bf16.msra.mxu0 0
        %483 = vmatpush.bf16.msra.mxu0 0
        %484 = vmatpush.bf16.msra.mxu0 0
        %485 = vmatpush.bf16.msra.mxu0 0
        %486 = vmatpush.bf16.msra.mxu0 %v474
        %487 = vmatpush.bf16.msra.mxu0 %v473
        %488 = vmatmul.bf16.gmra.mxu0 %v478
        %v489 = vpop.f32.mrf.mxu0
        %v490 = vadd.f32 %v463, %v489
        %v491 = vpop.f32.mrf.mxu0
        %v492 = vadd.f32 %v463, %v491
        %493 = vdwg.mxu0
        %v494 = vadd.f32 %v369, %v490
        %v495 = vadd.f32 %v370, %v492
        %v496 = vsel %vm371, %v494, 0.0
        %497 = vadd.xlane.f32.xlu0 %v496
        %v498 = vpop.xlane.xlu0 %497
        %v499 = vsel %vm371, %v495, 0.0
        %500 = vadd.xlane.f32.xlu0 %v499
        %v501 = vpop.xlane.xlu0 %500
        %v502 = vmul.f32 %v498, 0.03125
        %v503 = vmul.f32 %v501, 0.03125
        %v504 = vsub.f32 %v494, %v502
        %v505 = vsub.f32 %v495, %v503
        %v506 = vmul.f32 %v504, %v504
        %v507 = vmul.f32 %v505, %v505
        %v508 = vsel %vm371, %v506, 0.0
        %509 = vadd.xlane.f32.xlu0 %v508
        %v510 = vpop.xlane.xlu0 %509
        %v511 = vsel %vm371, %v507, 0.0
        %512 = vadd.xlane.f32.xlu0 %v511
        %v513 = vpop.xlane.xlu0 %512
        %v514 = vmul.f32 %v510, 0.03125
        %v515 = vmul.f32 %v513, 0.03125
        %v516 = vadd.f32 %v514, 1e-05
        %v517 = vadd.f32 %v515, 1e-05
        %v518 = vrsqrt.pop %v516
        %v519 = vmul.f32 %v518, %v516
        %v520 = vmul.f32 %v519, %v518
        %v521 = vmul.f32 0.5, %v520
        %v522 = vsub.f32 1.5, %v521
        %v523 = vmul.f32 %v518, %v522
        %vm524 = vweird.f32 %v516
        %vm525 = vweird.f32 %v518
        %vm526 = vmor %vm524, %vm525
        %v527 = vsel %vm526, %v518, %v523
        %v528 = vrsqrt.pop %v517
        %v529 = vmul.f32 %v528, %v517
        %v530 = vmul.f32 %v529, %v528
        %v531 = vmul.f32 0.5, %v530
        %v532 = vsub.f32 1.5, %v531
        %v533 = vmul.f32 %v528, %v532
        %vm534 = vweird.f32 %v517
        %vm535 = vweird.f32 %v528
        %vm536 = vmor %vm534, %vm535
        %v537 = vsel %vm536, %v528, %v533
        %v538 = vmul.f32 %v504, %v527
        %v539 = vmul.f32 %v505, %v537
        %v540 = vpack.c.bf16 %v539, %v538
        %s541 = scalar_lea.vmem [#allocation6], 16
        %v542 = vld [vmem:[%s541] sm:$0xf]
        %v543 = vld [vmem:[%s541 + $0x4] sm:$0xf]
        %v544 = vld [vmem:[%s541 + $0x8] sm:$0xf]
        %v545 = vld [vmem:[%s541 + $0xc] sm:$0xf]
        %s546 = scalar_lea.vmem [#allocation8], 1
        %v547 = vld [vmem:[%s546] sm:$0x1]
        %v549 = vperm.slane %v547, 0
        %v555 = vunpack.c.l.b16 %v542
        %v556 = vunpack.c.l.b16 %v543
        %v557 = vunpack.c.l.b16 %v544
        %v558 = vunpack.c.l.b16 %v545
        %v559 = vpack.c.b16 %v556, %v555
        %v560 = vpack.c.b16 %v558, %v557
        %v564 = vsel %vm371, %v540, 0
        %566 = vmatpush.bf16.msra.mxu0 0
        %567 = vmatpush.bf16.msra.mxu0 0
        %568 = vmatpush.bf16.msra.mxu0 0
        %569 = vmatpush.bf16.msra.mxu0 0
        %570 = vmatpush.bf16.msra.mxu0 0
        %571 = vmatpush.bf16.msra.mxu0 0
        %572 = vmatpush.bf16.msra.mxu0 %v560
        %573 = vmatpush.bf16.msra.mxu0 %v559
        %574 = vmatmul.bf16.gmra.mxu0 %v564
        %v575 = vpop.f32.mrf.mxu0
        %v576 = vadd.f32 %v549, %v575
        %v577 = vpop.f32.mrf.mxu0
        %v578 = vadd.f32 %v549, %v577
        %579 = vdwg.mxu0
        %v580 = vmax.f32 %v576, 0.0
        %v581 = vmax.f32 %v578, 0.0
        %v582 = vpack.c.bf16 %v581, %v580
        %s583 = scalar_lea.vmem [#allocation9], 16
        %v584 = vld [vmem:[%s583] sm:$0xf]
        %v585 = vld [vmem:[%s583 + $0x4] sm:$0xf]
        %v586 = vld [vmem:[%s583 + $0x8] sm:$0xf]
        %v587 = vld [vmem:[%s583 + $0xc] sm:$0xf]
        %s588 = scalar_lea.vmem %s4, 1
        %v589 = vld [vmem:[%s588] sm:$0x1]
        %v591 = vperm.slane %v589, 0
        %v597 = vunpack.c.l.b16 %v584
        %v598 = vunpack.c.l.b16 %v585
        %v599 = vunpack.c.l.b16 %v586
        %v600 = vunpack.c.l.b16 %v587
        %v601 = vpack.c.b16 %v598, %v597
        %v602 = vpack.c.b16 %v600, %v599
        %v606 = vsel %vm371, %v582, 0
        %608 = vmatpush.bf16.msra.mxu0 0
        %609 = vmatpush.bf16.msra.mxu0 0
        %610 = vmatpush.bf16.msra.mxu0 0
        %611 = vmatpush.bf16.msra.mxu0 0
        %612 = vmatpush.bf16.msra.mxu0 0
        %613 = vmatpush.bf16.msra.mxu0 0
        %614 = vmatpush.bf16.msra.mxu0 %v602
        %615 = vmatpush.bf16.msra.mxu0 %v601
        %616 = vmatmul.bf16.gmra.mxu0 %v606
        %v617 = vpop.f32.mrf.mxu0
        %v618 = vadd.f32 %v591, %v617
        %v619 = vpop.f32.mrf.mxu0
        %v620 = vadd.f32 %v591, %v619
        %621 = vdwg.mxu0
        %v622 = vadd.f32 %v494, %v618
        %v623 = vadd.f32 %v495, %v620
        %v624 = vlaneseq
        %vm625 = vcmp.ge.s32.totalorder %v624, 0
        %vm626 = vcmp.lt.s32.totalorder %v624, 32
        %vm627 = vmand %vm625, %vm626
        %628 = vst.msk [vmem:[#allocation2] sm:$0x1] %vm627, %v622
        %630 = vst [vmem:[#allocation1] sm:$0xff] %v622
        %s631 = scalar_lea.vmem [#allocation1], 1
        %v632 = vld [vmem:[%s631] ss:$9 sm:$0xff]
        %633 = vrot.lane.b32.xlu0 %v632, 32
        %v634 = vpop.permute.xlu0 %633
        %vm636 = vcmp.ge.s32.totalorder %v624, 32
        %vm637 = vcmp.lt.s32.totalorder %v624, 64
        %vm638 = vmand %vm636, %vm637
        %639 = vst.msk [vmem:[#allocation2] sm:$0x1] %vm638, %v634
        %640 = vst [vmem:[#allocation1] sm:$0xff] %v622
        %s641 = scalar_lea.vmem [#allocation1], 2
        %v642 = vld [vmem:[%s641] ss:$9 sm:$0xff]
        %643 = vrot.lane.b32.xlu0 %v642, 64
        %v644 = vpop.permute.xlu0 %643
        %vm646 = vcmp.ge.s32.totalorder %v624, 64
        %vm647 = vcmp.lt.s32.totalorder %v624, 96
        %vm648 = vmand %vm646, %vm647
        %649 = vst.msk [vmem:[#allocation2] sm:$0x1] %vm648, %v644
        %650 = vst [vmem:[#allocation1] sm:$0xff] %v622
        %s651 = scalar_lea.vmem [#allocation1], 3
        %v652 = vld [vmem:[%s651] ss:$9 sm:$0xff]
        %653 = vrot.lane.b32.xlu0 %v652, 96
        %v654 = vpop.permute.xlu0 %653
        %vm656 = vcmp.ge.s32.totalorder %v624, 96
        %vm657 = vcmp.lt.s32.totalorder %v624, 128
        %vm658 = vmand %vm656, %vm657
        %659 = vst.msk [vmem:[#allocation2] sm:$0x1] %vm658, %v654
        %660 = vst [vmem:[#allocation1] sm:$0xff] %v622
        %s661 = scalar_lea.vmem [#allocation1], 4
        %v662 = vld [vmem:[%s661] ss:$9 sm:$0xff]
        %664 = vst.msk [vmem:[#allocation2 + $0x1] sm:$0x1] %vm627, %v662
        %665 = vst [vmem:[#allocation1] sm:$0xff] %v622
        %s666 = scalar_lea.vmem [#allocation1], 5
        %v667 = vld [vmem:[%s666] ss:$9 sm:$0xff]
        %668 = vrot.lane.b32.xlu0 %v667, 32
        %v669 = vpop.permute.xlu0 %668
        %671 = vst.msk [vmem:[#allocation2 + $0x1] sm:$0x1] %vm638, %v669
        %672 = vst [vmem:[#allocation1] sm:$0xff] %v622
        %s673 = scalar_lea.vmem [#allocation1], 6
        %v674 = vld [vmem:[%s673] ss:$9 sm:$0xff]
        %675 = vrot.lane.b32.xlu0 %v674, 64
        %v676 = vpop.permute.xlu0 %675
        %678 = vst.msk [vmem:[#allocation2 + $0x1] sm:$0x1] %vm648, %v676
        %679 = vst [vmem:[#allocation1] sm:$0xff] %v622
        %s680 = scalar_lea.vmem [#allocation1], 7
        %v681 = vld [vmem:[%s680] ss:$9 sm:$0xff]
        %682 = vrot.lane.b32.xlu0 %v681, 96
        %v683 = vpop.permute.xlu0 %682
        %685 = vst.msk [vmem:[#allocation2 + $0x1] sm:$0x1] %vm658, %v683
        %686 = vst.msk [vmem:[#allocation2 + $0x2] sm:$0x1] %vm627, %v623
        %688 = vst [vmem:[#allocation1] sm:$0xff] %v623
        %s689 = scalar_lea.vmem [#allocation1], 1
        %v690 = vld [vmem:[%s689] ss:$9 sm:$0xff]
        %691 = vrot.lane.b32.xlu0 %v690, 32
        %v692 = vpop.permute.xlu0 %691
        %694 = vst.msk [vmem:[#allocation2 + $0x2] sm:$0x1] %vm638, %v692
        %695 = vst [vmem:[#allocation1] sm:$0xff] %v623
        %s696 = scalar_lea.vmem [#allocation1], 2
        %v697 = vld [vmem:[%s696] ss:$9 sm:$0xff]
        %698 = vrot.lane.b32.xlu0 %v697, 64
        %v699 = vpop.permute.xlu0 %698
        %701 = vst.msk [vmem:[#allocation2 + $0x2] sm:$0x1] %vm648, %v699
        %702 = vst [vmem:[#allocation1] sm:$0xff] %v623
        %s703 = scalar_lea.vmem [#allocation1], 3
        %v704 = vld [vmem:[%s703] ss:$9 sm:$0xff]
        %705 = vrot.lane.b32.xlu0 %v704, 96
        %v706 = vpop.permute.xlu0 %705
        %708 = vst.msk [vmem:[#allocation2 + $0x2] sm:$0x1] %vm658, %v706
        %709 = vst [vmem:[#allocation1] sm:$0xff] %v623
        %s710 = scalar_lea.vmem [#allocation1], 4
        %v711 = vld [vmem:[%s710] ss:$9 sm:$0xff]
        %713 = vst.msk [vmem:[#allocation2 + $0x3] sm:$0x1] %vm627, %v711
        %714 = vst [vmem:[#allocation1] sm:$0xff] %v623
        %s715 = scalar_lea.vmem [#allocation1], 5
        %v716 = vld [vmem:[%s715] ss:$9 sm:$0xff]
        %717 = vrot.lane.b32.xlu0 %v716, 32
        %v718 = vpop.permute.xlu0 %717
        %720 = vst.msk [vmem:[#allocation2 + $0x3] sm:$0x1] %vm638, %v718
        %721 = vst [vmem:[#allocation1] sm:$0xff] %v623
        %s722 = scalar_lea.vmem [#allocation1], 6
        %v723 = vld [vmem:[%s722] ss:$9 sm:$0xff]
        %724 = vrot.lane.b32.xlu0 %v723, 64
        %v725 = vpop.permute.xlu0 %724
        %727 = vst.msk [vmem:[#allocation2 + $0x3] sm:$0x1] %vm648, %v725
        %728 = vst [vmem:[#allocation1] sm:$0xff] %v623
        %s729 = scalar_lea.vmem [#allocation1], 7
        %v730 = vld [vmem:[%s729] ss:$9 sm:$0xff]
        %731 = vrot.lane.b32.xlu0 %v730, 96
        %v732 = vpop.permute.xlu0 %731
        %734 = vst.msk [vmem:[#allocation2 + $0x3] sm:$0x1] %vm658, %v732
        %v735 = vld [vmem:[#allocation2] sm:$0xf]
        %v737 = vperm.slane %v735, 0
        %v738 = vperm.slane %v735, 1
        %v739 = vperm.slane %v735, 2
        %v740 = vperm.slane %v735, 3
        %v745 = vpack.c.bf16 %v737, %v737
        %v746 = vpack.c.bf16 %v738, %v738
        %v747 = vpack.c.bf16 %v739, %v739
        %v748 = vpack.c.bf16 %v740, %v740
        %v749 = vld [vmem:[#allocation11] sm:$0xff]
        %v750 = vld [vmem:[#allocation11 + $0x8] sm:$0xff]
        %v751 = vld [vmem:[#allocation11 + $0x10] sm:$0xff]
        %v752 = vld [vmem:[#allocation11 + $0x18] sm:$0xff]
        %v753 = vld [vmem:[#allocation11 + $0x20] sm:$0xff]
        %v754 = vld [vmem:[#allocation11 + $0x28] sm:$0xff]
        %v755 = vld [vmem:[#allocation11 + $0x30] sm:$0xff]
        %v756 = vld [vmem:[#allocation11 + $0x38] sm:$0xff]
        %v757 = vld [vmem:[#allocation11 + $0x40] sm:$0xff]
        %v758 = vld [vmem:[#allocation11 + $0x48] sm:$0xff]
        %v759 = vld [vmem:[#allocation11 + $0x50] sm:$0xff]
        %v760 = vld [vmem:[#allocation11 + $0x58] sm:$0xff]
        %v761 = vld [vmem:[#allocation11 + $0x60] sm:$0xff]
        %v762 = vld [vmem:[#allocation11 + $0x68] sm:$0xff]
        %v763 = vld [vmem:[#allocation11 + $0x70] sm:$0xff]
        %v764 = vld [vmem:[#allocation11 + $0x78] sm:$0xff]
        %v765 = vld [vmem:[#allocation11 + $0x80] sm:$0xff]
        %v766 = vld [vmem:[#allocation11 + $0x88] sm:$0xff]
        %v767 = vld [vmem:[#allocation11 + $0x90] sm:$0xff]
        %v768 = vld [vmem:[#allocation11 + $0x98] sm:$0xff]
        %v769 = vld [vmem:[#allocation11 + $0xa0] sm:$0xff]
        %v770 = vld [vmem:[#allocation11 + $0xa8] sm:$0xff]
        %v771 = vld [vmem:[#allocation11 + $0xb0] sm:$0xff]
        %v772 = vld [vmem:[#allocation11 + $0xb8] sm:$0xff]
        %v773 = vld [vmem:[#allocation11 + $0xc0] sm:$0xff]
        %v774 = vld [vmem:[#allocation11 + $0xc8] sm:$0xff]
        %v775 = vld [vmem:[#allocation11 + $0xd0] sm:$0xff]
        %v776 = vld [vmem:[#allocation11 + $0xd8] sm:$0xff]
        %v777 = vld [vmem:[#allocation11 + $0xe0] sm:$0xff]
        %v778 = vld [vmem:[#allocation11 + $0xe8] sm:$0xff]
        %v779 = vld [vmem:[#allocation11 + $0xf0] sm:$0xff]
        %v780 = vld [vmem:[#allocation11 + $0xf8] sm:$0xff]
        %v781 = vld [vmem:[#allocation11 + $0x100] sm:$0xff]
        %v782 = vld [vmem:[#allocation11 + $0x108] sm:$0xff]
        %v783 = vld [vmem:[#allocation11 + $0x110] sm:$0xff]
        %v784 = vld [vmem:[#allocation11 + $0x118] sm:$0xff]
        %v785 = vld [vmem:[#allocation11 + $0x120] sm:$0xff]
        %v786 = vld [vmem:[#allocation11 + $0x128] sm:$0xff]
        %v787 = vld [vmem:[#allocation11 + $0x130] sm:$0xff]
        %v788 = vld [vmem:[#allocation11 + $0x138] sm:$0xff]
        %v789 = vld [vmem:[#allocation11 + $0x140] sm:$0xff]
        %v790 = vld [vmem:[#allocation11 + $0x148] sm:$0xff]
        %v791 = vld [vmem:[#allocation11 + $0x150] sm:$0xff]
        %v792 = vld [vmem:[#allocation11 + $0x158] sm:$0xff]
        %v793 = vld [vmem:[#allocation11 + $0x160] sm:$0xff]
        %v794 = vld [vmem:[#allocation11 + $0x168] sm:$0xff]
        %v795 = vld [vmem:[#allocation11 + $0x170] sm:$0xff]
        %v796 = vld [vmem:[#allocation11 + $0x178] sm:$0xff]
        %v797 = vld [vmem:[#allocation11 + $0x180] sm:$0xff]
        %v798 = vld [vmem:[#allocation11 + $0x188] sm:$0xff]
        %v799 = vld [vmem:[#allocation11 + $0x190] sm:$0xff]
        %v800 = vld [vmem:[#allocation11 + $0x198] sm:$0xff]
        %v801 = vld [vmem:[#allocation11 + $0x1a0] sm:$0xff]
        %v802 = vld [vmem:[#allocation11 + $0x1a8] sm:$0xff]
        %v803 = vld [vmem:[#allocation11 + $0x1b0] sm:$0xff]
        %v804 = vld [vmem:[#allocation11 + $0x1b8] sm:$0xff]
        %v805 = vld [vmem:[#allocation11 + $0x1c0] sm:$0xff]
        %v806 = vld [vmem:[#allocation11 + $0x1c8] sm:$0xff]
        %v807 = vld [vmem:[#allocation11 + $0x1d0] sm:$0xff]
        %v808 = vld [vmem:[#allocation11 + $0x1d8] sm:$0xff]
        %v809 = vld [vmem:[#allocation11 + $0x1e0] sm:$0xff]
        %v810 = vld [vmem:[#allocation11 + $0x1e8] sm:$0xff]
        %v811 = vld [vmem:[#allocation11 + $0x1f0] sm:$0xff]
        %v812 = vld [vmem:[#allocation11 + $0x1f8] sm:$0xff]
        %v813 = vld [vmem:[%s6] sm:$0x3]
        %v878 = vunpack.c.l.b16 %v749
        %v879 = vunpack.c.h.b16 %v749
        %v880 = vunpack.c.l.b16 %v750
        %v881 = vunpack.c.h.b16 %v750
        %v882 = vunpack.c.l.b16 %v751
        %v883 = vunpack.c.h.b16 %v751
        %v884 = vunpack.c.l.b16 %v752
        %v885 = vunpack.c.h.b16 %v752
        %v886 = vunpack.c.l.b16 %v753
        %v887 = vunpack.c.h.b16 %v753
        %v888 = vunpack.c.l.b16 %v754
        %v889 = vunpack.c.h.b16 %v754
        %v890 = vunpack.c.l.b16 %v755
        %v891 = vunpack.c.h.b16 %v755
        %v892 = vunpack.c.l.b16 %v756
        %v893 = vunpack.c.h.b16 %v756
        %v894 = vunpack.c.l.b16 %v757
        %v895 = vunpack.c.h.b16 %v757
        %v896 = vunpack.c.l.b16 %v758
        %v897 = vunpack.c.h.b16 %v758
        %v898 = vunpack.c.l.b16 %v759
        %v899 = vunpack.c.h.b16 %v759
        %v900 = vunpack.c.l.b16 %v760
        %v901 = vunpack.c.h.b16 %v760
        %v902 = vunpack.c.l.b16 %v761
        %v903 = vunpack.c.h.b16 %v761
        %v904 = vunpack.c.l.b16 %v762
        %v905 = vunpack.c.h.b16 %v762
        %v906 = vunpack.c.l.b16 %v763
        %v907 = vunpack.c.h.b16 %v763
        %v908 = vunpack.c.l.b16 %v764
        %v909 = vunpack.c.h.b16 %v764
        %v910 = vunpack.c.l.b16 %v765
        %v911 = vunpack.c.h.b16 %v765
        %v912 = vunpack.c.l.b16 %v766
        %v913 = vunpack.c.h.b16 %v766
        %v914 = vunpack.c.l.b16 %v767
        %v915 = vunpack.c.h.b16 %v767
        %v916 = vunpack.c.l.b16 %v768
        %v917 = vunpack.c.h.b16 %v768
        %v918 = vunpack.c.l.b16 %v769
        %v919 = vunpack.c.h.b16 %v769
        %v920 = vunpack.c.l.b16 %v770
        %v921 = vunpack.c.h.b16 %v770
        %v922 = vunpack.c.l.b16 %v771
        %v923 = vunpack.c.h.b16 %v771
        %v924 = vunpack.c.l.b16 %v772
        %v925 = vunpack.c.h.b16 %v772
        %v926 = vunpack.c.l.b16 %v773
        %v927 = vunpack.c.h.b16 %v773
        %v928 = vunpack.c.l.b16 %v774
        %v929 = vunpack.c.h.b16 %v774
        %v930 = vunpack.c.l.b16 %v775
        %v931 = vunpack.c.h.b16 %v775
        %v932 = vunpack.c.l.b16 %v776
        %v933 = vunpack.c.h.b16 %v776
        %v934 = vunpack.c.l.b16 %v777
        %v935 = vunpack.c.h.b16 %v777
        %v936 = vunpack.c.l.b16 %v778
        %v937 = vunpack.c.h.b16 %v778
        %v938 = vunpack.c.l.b16 %v779
        %v939 = vunpack.c.h.b16 %v779
        %v940 = vunpack.c.l.b16 %v780
        %v941 = vunpack.c.h.b16 %v780
        %v942 = vunpack.c.l.b16 %v781
        %v943 = vunpack.c.h.b16 %v781
        %v944 = vunpack.c.l.b16 %v782
        %v945 = vunpack.c.h.b16 %v782
        %v946 = vunpack.c.l.b16 %v783
        %v947 = vunpack.c.h.b16 %v783
        %v948 = vunpack.c.l.b16 %v784
        %v949 = vunpack.c.h.b16 %v784
        %v950 = vunpack.c.l.b16 %v785
        %v951 = vunpack.c.h.b16 %v785
        %v952 = vunpack.c.l.b16 %v786
        %v953 = vunpack.c.h.b16 %v786
        %v954 = vunpack.c.l.b16 %v787
        %v955 = vunpack.c.h.b16 %v787
        %v956 = vunpack.c.l.b16 %v788
        %v957 = vunpack.c.h.b16 %v788
        %v958 = vunpack.c.l.b16 %v789
        %v959 = vunpack.c.h.b16 %v789
        %v960 = vunpack.c.l.b16 %v790
        %v961 = vunpack.c.h.b16 %v790
        %v962 = vunpack.c.l.b16 %v791
        %v963 = vunpack.c.h.b16 %v791
        %v964 = vunpack.c.l.b16 %v792
        %v965 = vunpack.c.h.b16 %v792
        %v966 = vunpack.c.l.b16 %v793
        %v967 = vunpack.c.h.b16 %v793
        %v968 = vunpack.c.l.b16 %v794
        %v969 = vunpack.c.h.b16 %v794
        %v970 = vunpack.c.l.b16 %v795
        %v971 = vunpack.c.h.b16 %v795
        %v972 = vunpack.c.l.b16 %v796
        %v973 = vunpack.c.h.b16 %v796
        %v974 = vunpack.c.l.b16 %v797
        %v975 = vunpack.c.h.b16 %v797
        %v976 = vunpack.c.l.b16 %v798
        %v977 = vunpack.c.h.b16 %v798
        %v978 = vunpack.c.l.b16 %v799
        %v979 = vunpack.c.h.b16 %v799
        %v980 = vunpack.c.l.b16 %v800
        %v981 = vunpack.c.h.b16 %v800
        %v982 = vunpack.c.l.b16 %v801
        %v983 = vunpack.c.h.b16 %v801
        %v984 = vunpack.c.l.b16 %v802
        %v985 = vunpack.c.h.b16 %v802
        %v986 = vunpack.c.l.b16 %v803
        %v987 = vunpack.c.h.b16 %v803
        %v988 = vunpack.c.l.b16 %v804
        %v989 = vunpack.c.h.b16 %v804
        %v990 = vunpack.c.l.b16 %v805
        %v991 = vunpack.c.h.b16 %v805
        %v992 = vunpack.c.l.b16 %v806
        %v993 = vunpack.c.h.b16 %v806
        %v994 = vunpack.c.l.b16 %v807
        %v995 = vunpack.c.h.b16 %v807
        %v996 = vunpack.c.l.b16 %v808
        %v997 = vunpack.c.h.b16 %v808
        %v998 = vunpack.c.l.b16 %v809
        %v999 = vunpack.c.h.b16 %v809
        %v1000 = vunpack.c.l.b16 %v810
        %v1001 = vunpack.c.h.b16 %v810
        %v1002 = vunpack.c.l.b16 %v811
        %v1003 = vunpack.c.h.b16 %v811
        %v1004 = vunpack.c.l.b16 %v812
        %v1005 = vunpack.c.h.b16 %v812
        %v1006 = vpack.c.b16 %v880, %v878
        %v1007 = vpack.c.b16 %v881, %v879
        %v1008 = vpack.c.b16 %v884, %v882
        %v1009 = vpack.c.b16 %v885, %v883
        %v1010 = vpack.c.b16 %v888, %v886
        %v1011 = vpack.c.b16 %v889, %v887
        %v1012 = vpack.c.b16 %v892, %v890
        %v1013 = vpack.c.b16 %v893, %v891
        %v1014 = vpack.c.b16 %v896, %v894
        %v1015 = vpack.c.b16 %v897, %v895
        %v1016 = vpack.c.b16 %v900, %v898
        %v1017 = vpack.c.b16 %v901, %v899
        %v1018 = vpack.c.b16 %v904, %v902
        %v1019 = vpack.c.b16 %v905, %v903
        %v1020 = vpack.c.b16 %v908, %v906
        %v1021 = vpack.c.b16 %v909, %v907
        %v1022 = vpack.c.b16 %v912, %v910
        %v1023 = vpack.c.b16 %v913, %v911
        %v1024 = vpack.c.b16 %v916, %v914
        %v1025 = vpack.c.b16 %v917, %v915
        %v1026 = vpack.c.b16 %v920, %v918
        %v1027 = vpack.c.b16 %v921, %v919
        %v1028 = vpack.c.b16 %v924, %v922
        %v1029 = vpack.c.b16 %v925, %v923
        %v1030 = vpack.c.b16 %v928, %v926
        %v1031 = vpack.c.b16 %v929, %v927
        %v1032 = vpack.c.b16 %v932, %v930
        %v1033 = vpack.c.b16 %v933, %v931
        %v1034 = vpack.c.b16 %v936, %v934
        %v1035 = vpack.c.b16 %v937, %v935
        %v1036 = vpack.c.b16 %v940, %v938
        %v1037 = vpack.c.b16 %v941, %v939
        %v1038 = vpack.c.b16 %v944, %v942
        %v1039 = vpack.c.b16 %v945, %v943
        %v1040 = vpack.c.b16 %v948, %v946
        %v1041 = vpack.c.b16 %v949, %v947
        %v1042 = vpack.c.b16 %v952, %v950
        %v1043 = vpack.c.b16 %v953, %v951
        %v1044 = vpack.c.b16 %v956, %v954
        %v1045 = vpack.c.b16 %v957, %v955
        %v1046 = vpack.c.b16 %v960, %v958
        %v1047 = vpack.c.b16 %v961, %v959
        %v1048 = vpack.c.b16 %v964, %v962
        %v1049 = vpack.c.b16 %v965, %v963
        %v1050 = vpack.c.b16 %v968, %v966
        %v1051 = vpack.c.b16 %v969, %v967
        %v1052 = vpack.c.b16 %v972, %v970
        %v1053 = vpack.c.b16 %v973, %v971
        %v1054 = vpack.c.b16 %v976, %v974
        %v1055 = vpack.c.b16 %v977, %v975
        %v1056 = vpack.c.b16 %v980, %v978
        %v1057 = vpack.c.b16 %v981, %v979
        %v1058 = vpack.c.b16 %v984, %v982
        %v1059 = vpack.c.b16 %v985, %v983
        %v1060 = vpack.c.b16 %v988, %v986
        %v1061 = vpack.c.b16 %v989, %v987
        %v1062 = vpack.c.b16 %v992, %v990
        %v1063 = vpack.c.b16 %v993, %v991
        %v1064 = vpack.c.b16 %v996, %v994
        %v1065 = vpack.c.b16 %v997, %v995
        %v1066 = vpack.c.b16 %v1000, %v998
        %v1067 = vpack.c.b16 %v1001, %v999
        %v1068 = vpack.c.b16 %v1004, %v1002
        %v1069 = vpack.c.b16 %v1005, %v1003
        %v1135 = vperm.slane %v813, 0
        %v1136 = vperm.slane %v813, 1
        %1139 = vmatpush.bf16.msra.mxu0 %v1020
        %1140 = vmatpush.bf16.msra.mxu0 %v1018
        %1141 = vmatpush.bf16.msra.mxu0 %v1016
        %1142 = vmatpush.bf16.msra.mxu0 %v1014
        %1143 = vmatpush.bf16.msra.mxu0 %v1012
        %1144 = vmatpush.bf16.msra.mxu0 %v1010
        %1145 = vmatpush.bf16.msra.mxu0 %v1008
        %1146 = vmatpush.bf16.msra.mxu0 %v1006
        %1147 = vmatmul.bf16.gmra.mxu0 %v745
        %v1148 = vpop.f32.mrf.mxu0
        %v1149 = vadd.f32 %v1135, %v1148
        %v1150 = vpop.f32.mrf.mxu0
        %1151 = vdwg.mxu0
        %1152 = vmatpush.bf16.msra.mxu0 %v1036
        %1153 = vmatpush.bf16.msra.mxu0 %v1034
        %1154 = vmatpush.bf16.msra.mxu0 %v1032
        %1155 = vmatpush.bf16.msra.mxu0 %v1030
        %1156 = vmatpush.bf16.msra.mxu0 %v1028
        %1157 = vmatpush.bf16.msra.mxu0 %v1026
        %1158 = vmatpush.bf16.msra.mxu0 %v1024
        %1159 = vmatpush.bf16.msra.mxu0 %v1022
        %1160 = vmatmul.bf16.gmra.mxu0 %v746
        %v1161 = vpop.f32.mrf.mxu0
        %v1162 = vadd.f32 %v1149, %v1161
        %v1163 = vpop.f32.mrf.mxu0
        %1164 = vdwg.mxu0
        %1165 = vmatpush.bf16.msra.mxu0 %v1052
        %1166 = vmatpush.bf16.msra.mxu0 %v1050
        %1167 = vmatpush.bf16.msra.mxu0 %v1048
        %1168 = vmatpush.bf16.msra.mxu0 %v1046
        %1169 = vmatpush.bf16.msra.mxu0 %v1044
        %1170 = vmatpush.bf16.msra.mxu0 %v1042
        %1171 = vmatpush.bf16.msra.mxu0 %v1040
        %1172 = vmatpush.bf16.msra.mxu0 %v1038
        %1173 = vmatmul.bf16.gmra.mxu0 %v747
        %v1174 = vpop.f32.mrf.mxu0
        %v1175 = vadd.f32 %v1162, %v1174
        %v1176 = vpop.f32.mrf.mxu0
        %1177 = vdwg.mxu0
        %1178 = vmatpush.bf16.msra.mxu0 %v1068
        %1179 = vmatpush.bf16.msra.mxu0 %v1066
        %1180 = vmatpush.bf16.msra.mxu0 %v1064
        %1181 = vmatpush.bf16.msra.mxu0 %v1062
        %1182 = vmatpush.bf16.msra.mxu0 %v1060
        %1183 = vmatpush.bf16.msra.mxu0 %v1058
        %1184 = vmatpush.bf16.msra.mxu0 %v1056
        %1185 = vmatpush.bf16.msra.mxu0 %v1054
        %1186 = vmatmul.bf16.gmra.mxu0 %v748
        %v1187 = vpop.f32.mrf.mxu0
        %v1188 = vadd.f32 %v1175, %v1187
        %v1189 = vpop.f32.mrf.mxu0
        %1190 = vdwg.mxu0
        %1191 = vmatpush.bf16.msra.mxu0 %v1021
        %1192 = vmatpush.bf16.msra.mxu0 %v1019
        %1193 = vmatpush.bf16.msra.mxu0 %v1017
        %1194 = vmatpush.bf16.msra.mxu0 %v1015
        %1195 = vmatpush.bf16.msra.mxu0 %v1013
        %1196 = vmatpush.bf16.msra.mxu0 %v1011
        %1197 = vmatpush.bf16.msra.mxu0 %v1009
        %1198 = vmatpush.bf16.msra.mxu0 %v1007
        %1199 = vmatmul.bf16.gmra.mxu0 %v745
        %v1200 = vpop.f32.mrf.mxu0
        %v1201 = vadd.f32 %v1136, %v1200
        %v1202 = vpop.f32.mrf.mxu0
        %1203 = vdwg.mxu0
        %1204 = vmatpush.bf16.msra.mxu0 %v1037
        %1205 = vmatpush.bf16.msra.mxu0 %v1035
        %1206 = vmatpush.bf16.msra.mxu0 %v1033
        %1207 = vmatpush.bf16.msra.mxu0 %v1031
        %1208 = vmatpush.bf16.msra.mxu0 %v1029
        %1209 = vmatpush.bf16.msra.mxu0 %v1027
        %1210 = vmatpush.bf16.msra.mxu0 %v1025
        %1211 = vmatpush.bf16.msra.mxu0 %v1023
        %1212 = vmatmul.bf16.gmra.mxu0 %v746
        %v1213 = vpop.f32.mrf.mxu0
        %v1214 = vadd.f32 %v1201, %v1213
        %v1215 = vpop.f32.mrf.mxu0
        %1216 = vdwg.mxu0
        %1217 = vmatpush.bf16.msra.mxu0 %v1053
        %1218 = vmatpush.bf16.msra.mxu0 %v1051
        %1219 = vmatpush.bf16.msra.mxu0 %v1049
        %1220 = vmatpush.bf16.msra.mxu0 %v1047
        %1221 = vmatpush.bf16.msra.mxu0 %v1045
        %1222 = vmatpush.bf16.msra.mxu0 %v1043
        %1223 = vmatpush.bf16.msra.mxu0 %v1041
        %1224 = vmatpush.bf16.msra.mxu0 %v1039
        %1225 = vmatmul.bf16.gmra.mxu0 %v747
        %v1226 = vpop.f32.mrf.mxu0
        %v1227 = vadd.f32 %v1214, %v1226
        %v1228 = vpop.f32.mrf.mxu0
        %1229 = vdwg.mxu0
        %1230 = vmatpush.bf16.msra.mxu0 %v1069
        %1231 = vmatpush.bf16.msra.mxu0 %v1067
        %1232 = vmatpush.bf16.msra.mxu0 %v1065
        %1233 = vmatpush.bf16.msra.mxu0 %v1063
        %1234 = vmatpush.bf16.msra.mxu0 %v1061
        %1235 = vmatpush.bf16.msra.mxu0 %v1059
        %1236 = vmatpush.bf16.msra.mxu0 %v1057
        %1237 = vmatpush.bf16.msra.mxu0 %v1055
        %1238 = vmatmul.bf16.gmra.mxu0 %v748
        %v1239 = vpop.f32.mrf.mxu0
        %v1240 = vadd.f32 %v1227, %v1239
        %v1241 = vpop.f32.mrf.mxu0
        %1242 = vdwg.mxu0
        %v1243 = vmul.f32 %v1188, %v1188
        %v1244 = vmul.f32 %v1240, %v1240
        %vm1245 = vcmask 1040384
        %v1246 = vsel %vm1245, %v1243, 0.0
        %v1247 = vsel %vm1245, %v1244, 0.0
        %v1248 = vadd.f32 %v1246, %v1247
        %1249 = vadd.xlane.f32.xlu0 %v1248
        %v1250 = vpop.xlane.xlu0 %1249
        %v1251 = vmax.f32 %v1250, 1e-24
        %v1252 = vrsqrt.pop %v1251
        %v1253 = vmul.f32 %v1252, %v1251
        %v1254 = vmul.f32 %v1253, %v1252
        %v1255 = vmul.f32 0.5, %v1254
        %v1256 = vsub.f32 1.5, %v1255
        %v1257 = vmul.f32 %v1252, %v1256
        %vm1258 = vweird.f32 %v1251
        %vm1259 = vweird.f32 %v1252
        %vm1260 = vmor %vm1258, %vm1259
        %v1261 = vsel %vm1260, %v1252, %v1257
        %v1262 = vmul.f32 %v1188, %v1261
        %v1263 = vmul.f32 %v1240, %v1261
        %v1266 = vrot.slane %v1263, 7
        %v1267 = vsel %vm1245, %v1262, %v1266
        %vm1269 = vcmp.lt.s32.totalorder %v624, 256
        %vm1270 = vmand %vm625, %vm1269
        %1271 = vst.msk [vmem:[%s364] sm:$0x3] %vm1270, %v1267
        %s1272 = sand.u32 %s186, 1
        %s1273 = scalar_lea.sflag [#allocation5], %s1272
        %s1274 = sand.u32 %s186, 1
        %s1275 = smul.addr %s1274, 2
        %s1276 = scalar_lea.vmem [#allocation12], %s1275
        // Predicated region
        $region69: #{tpu_custom_call.1} parent=47 // pred_check
          %p1277 = pneg %p196
        $region70: #{tpu_custom_call.1} parent=47 // pred_check_branch
          %1279 = sbr.rel (%p1277) target = $region72
        $region71: #{tpu_custom_call.1} parent=47 // pred_region
          %1281 = vsyncadd %s1273, 0
          %s1282 = smul.addr %s26, 2
          %s1283 = scalar_lea.hbm %s7, %s1282
          %s1285 = sshll.u32 %s1276, 4
          %s1286 = int_to_ptr.vmem [resolvable:$true] %s1285
          %s1287 = sshll.u32 %s1283, 4
          %s1288 = int_to_ptr.hbm [resolvable:$true] %s1287
          %1290 = dma.vmem_to_hbm [thread:$0]  %s1286, 32, %s1288, %s1273
        $region72: #{tpu_custom_call.1} parent=47 // pred_fallthru
          _
      $region48: #{tpu_custom_call.1} parent=5 // pred_fallthru
        _
      %p1291 = scmp.le.s32.totalorder 2, %s21
      // Predicated region
      $region73: #{tpu_custom_call.1} parent=5 // pred_check
        %p1292 = pneg %p1291
      $region74: #{tpu_custom_call.1} parent=5 // pred_check_branch
        %1294 = sbr.rel (%p1292) target = $region76
      $region75: #{tpu_custom_call.1} parent=5 // pred_region
        %s1295 = ssub.s32 %s21, 2
        // Predicated region
        $region77: #{tpu_custom_call.1} parent=75 // pred_check
          %p1296 = pneg %p202
        $region78: #{tpu_custom_call.1} parent=75 // pred_check_branch
          %1298 = sbr.rel (%p1296) target = $region80
        $region79: #{tpu_custom_call.1} parent=75 // pred_region
          %s1299 = sand.u32 %s187, 1
          %s1300 = scalar_lea.sflag [#allocation5], %s1299
          %s1301 = sand.u32 %s187, 1
          %s1302 = smul.addr %s1301, 2
          %s1303 = scalar_lea.vmem [#allocation12], %s1302
          %1305 = dma.done %s1300, 32
        $region80: #{tpu_custom_call.1} parent=75 // pred_fallthru
          _
      $region76: #{tpu_custom_call.1} parent=5 // pred_fallthru
        _
    $region6: #{tpu_custom_call.1} parent=1 // loop_footer
      %s25 = sadd.s32 1, %s21
    $region7: #{tpu_custom_call.1} parent=1 // loop_footer_branch
      %20 = sbr.rel target = $region3
    $region8: #{tpu_custom_call.1} parent=1 // loop_exit
      _
    %1306 = vsyncpa [#allocation4], 1
    %s1307 = scalar_lea.sflag [#allocation4], 1
    %1308 = vsyncpa %s1307, 1
    %1309 = vsyncpa [#allocation7], 1
    %1310 = vsyncpa [#allocation10], 1
    %1311 = vsyncpa [#allocation5], 1
    %s1312 = scalar_lea.sflag [#allocation5], 1
    %1313 = vsyncpa %s1312, 1

</llo_original>
